<compile_context>
chip_gen: v7x
topology: tpu7x:2x2x1
jax: 0.10.0
libtpu: 0.0.40
codegen_flags: <defaults>
</compile_context>

<pallas_src>
import jax
import jax.numpy as jnp
from jax.experimental import pallas as pl
from jax.experimental.pallas import tpu as pltpu


def _round_up(x, m):
    return (x + m - 1) // m * m


def _gru_kernel(x_ref, wih_ref, bii_ref, whh_ref, bhn_ref, wout_ref, bout_ref,
                out_ref):
    """Full GRU recurrence + linear head in one kernel invocation.

    x_ref   : (T, Bp, 1)   time-major input (F == 1)
    wih_ref : (1, 3*Hp)    packed input->hidden weights  [r | z | n]
    bii_ref : (1, 3*Hp)    input bias; r/z slots also carry the folded b_hh_r/z
    whh_ref : (Hp, 3*Hp)   packed hidden->hidden weights [r | z | n]
    bhn_ref : (1, Hp)      b_hh for the n gate (must stay inside the r*() term)
    wout_ref: (Hp, Op)     Linear weight (transposed)
    bout_ref: (1, Op)      Linear bias
    out_ref : (Bp, Op)     output
    """
    T = x_ref.shape[0]
    Bp = x_ref.shape[1]
    Hp = whh_ref.shape[0]

    # Hoist all loop-invariant loads / broadcasts out of the recurrence.
    wih = wih_ref[...]                                  # (1, 3Hp)
    bii = bii_ref[...]                                  # (1, 3Hp)
    whh = whh_ref[...]                                  # (Hp, 3Hp)
    bhn = jnp.broadcast_to(bhn_ref[...], (Bp, Hp))      # (Bp, Hp)

    def step(t, h):
        x_t = x_ref[t]                                  # (Bp, 1)
        # F == 1 => input projection is a rank-1 broadcast on the VPU.
        gi = x_t * wih + bii                            # (Bp, 3Hp)
        # One packed MXU matmul per step for all three gates.
        gh = jnp.dot(h, whh, preferred_element_type=jnp.float32)   # (Bp, 3Hp)
        r = jax.nn.sigmoid(gi[:, :Hp] + gh[:, :Hp])
        z = jax.nn.sigmoid(gi[:, Hp:2 * Hp] + gh[:, Hp:2 * Hp])
        n = jnp.tanh(gi[:, 2 * Hp:] + r * (gh[:, 2 * Hp:] + bhn))
        return (1.0 - z) * n + z * h                    # (Bp, Hp)

    h0 = jnp.zeros((Bp, Hp), jnp.float32)
    h_last = jax.lax.fori_loop(0, T, step, h0, unroll=(T <= 64))

    out_ref[...] = (jnp.dot(h_last, wout_ref[...],
                            preferred_element_type=jnp.float32)
                    + bout_ref[...])


def gru_net_forward(x, params):
    """x: (B, T) float32 -> (B, n_output) float32, matching GRU_net.forward."""
    w_ih, w_hh, b_ih, b_hh, w_out, b_out = params
    B, T = x.shape
    _, F, H = w_ih.shape
    O = w_out.shape[1]
    assert F == 1, "GRU_net.forward uses x.unsqueeze(2), so n_feature must be 1"

    f32 = jnp.float32
    Bp = _round_up(B, 8)      # sublane-friendly batch
    Hp = _round_up(H, 128)    # lane-friendly hidden size
    Op = _round_up(O, 128)    # lane-dense output store

    def pad2(a, rows, cols):
        a = a.astype(f32)
        return jnp.pad(a, ((0, rows - a.shape[0]), (0, cols - a.shape[1])))

    # Pack per-gate weights along the lane axis (gate order r | z | n, as PyTorch).
    wih_p = jnp.concatenate([pad2(w_ih[g], 1, Hp) for g in range(3)], axis=1)
    # Fold b_ih (all gates) with b_hh for r/z only; b_hh_n must stay separate.
    bii_p = jnp.concatenate([pad2(b_ih[0] + b_hh[0], 1, Hp),
                             pad2(b_ih[1] + b_hh[1], 1, Hp),
                             pad2(b_ih[2], 1, Hp)], axis=1)
    whh_p = jnp.concatenate([pad2(w_hh[g], Hp, Hp) for g in range(3)], axis=1)
    bhn_p = pad2(b_hh[2], 1, Hp)
    wout_p = pad2(w_out, Hp, Op)
    bout_p = pad2(b_out, 1, Op)

    # x: (B, T) -> zero-pad batch -> time-major (T, Bp, 1)
    x_p = jnp.pad(x.astype(f32), ((0, Bp - B), (0, 0)))
    x_tb1 = jnp.transpose(x_p, (1, 0))[:, :, None]

    out_p = pl.pallas_call(
        _gru_kernel,
        out_shape=jax.ShapeDtypeStruct((Bp, Op), f32),
        grid_spec=pltpu.PrefetchScalarGridSpec(
            num_scalar_prefetch=0,
            grid=(1,),                      # whole recurrence in one invocation
            in_specs=[
                pl.BlockSpec((T, Bp, 1), lambda i: (0, 0, 0)),
                pl.BlockSpec((1, 3 * Hp), lambda i: (0, 0)),
                pl.BlockSpec((1, 3 * Hp), lambda i: (0, 0)),
                pl.BlockSpec((Hp, 3 * Hp), lambda i: (0, 0)),
                pl.BlockSpec((1, Hp), lambda i: (0, 0)),
                pl.BlockSpec((Hp, Op), lambda i: (0, 0)),
                pl.BlockSpec((1, Op), lambda i: (0, 0)),
            ],
            out_specs=pl.BlockSpec((Bp, Op), lambda i: (0, 0)),
        ),
        compiler_params=pltpu.CompilerParams(
            dimension_semantics=("arbitrary",),
            vmem_limit_bytes=32 * 1024 * 1024),
    )(x_tb1, wih_p, bii_p, whh_p, bhn_p, wout_p, bout_p)

    return out_p[:B, :O]


def init_params(key, n_feature, n_hidden, n_output):
    """Deterministic PyTorch-style uniform(-1/sqrt(H), 1/sqrt(H)) init."""
    ks = jax.random.split(key, 6)
    bound = 1.0 / jnp.sqrt(jnp.float32(n_hidden))
    u = lambda k, shp: jax.random.uniform(k, shp, jnp.float32, -bound, bound)
    # Stored already transposed / per-gate packed (gate order r, z, n):
    w_ih = u(ks[0], (3, n_feature, n_hidden))   # == weight_ih_l0.T split per gate
    w_hh = u(ks[1], (3, n_hidden, n_hidden))    # == weight_hh_l0.T split per gate
    b_ih = u(ks[2], (3, 1, n_hidden))
    b_hh = u(ks[3], (3, 1, n_hidden))
    w_out = u(ks[4], (n_hidden, n_output))      # == Linear.weight.T
    b_out = u(ks[5], (1, n_output))
    return (w_ih, w_hh, b_ih, b_hh, w_out, b_out)


def gru_net_ref(x, params):
    """Pure-JAX reference mirroring torch.nn.GRU + Linear, for validation."""
    w_ih, w_hh, b_ih, b_hh, w_out, b_out = params
    B, T = x.shape
    H = w_hh.shape[-1]
    x_tbf = jnp.transpose(x[..., None].astype(jnp.float32), (1, 0, 2))

    def step(h, x_t):
        i_r = x_t @ w_ih[0] + b_ih[0]
        i_z = x_t @ w_ih[1] + b_ih[1]
        i_n = x_t @ w_ih[2] + b_ih[2]
        h_r = h @ w_hh[0] + b_hh[0]
        h_z = h @ w_hh[1] + b_hh[1]
        h_n = h @ w_hh[2] + b_hh[2]
        r = jax.nn.sigmoid(i_r + h_r)
        z = jax.nn.sigmoid(i_z + h_z)
        n = jnp.tanh(i_n + r * h_n)
        h_new = (1.0 - z) * n + z * h
        return h_new, None

    h_last, _ = jax.lax.scan(step, jnp.zeros((B, H), jnp.float32), x_tbf)
    return h_last @ w_out + b_out


if __name__ == "__main__":
    B, T = 2, 8          # batch, sequence length
    n_feature = 1        # forced by x.unsqueeze(2) in the PyTorch forward
    n_hidden = 32
    n_output = 4

    key = jax.random.PRNGKey(0)
    k_x, k_p = jax.random.split(key)
    x = jax.random.normal(k_x, (B, T), jnp.float32)
    params = init_params(k_p, n_feature, n_hidden, n_output)

    out = jax.block_until_ready(gru_net_forward(x, params))
    ref = jax.block_until_ready(gru_net_ref(x, params))

    assert out.shape == (B, n_output)
    assert jnp.allclose(out, ref, atol=1e-4, rtol=1e-4), (out, ref)
    print("KERNEL_OK")
</pallas_src>

<mosaic_0001>
module attributes {stable_mosaic.version = 11 : i64} {
  func.func @_gru_kernel(%arg0: i32, %arg1: memref<8x8x1xf32, #tpu.memory_space<vmem>>, %arg2: memref<1x384xf32, #tpu.memory_space<vmem>>, %arg3: memref<1x384xf32, #tpu.memory_space<vmem>>, %arg4: memref<128x384xf32, #tpu.memory_space<vmem>>, %arg5: memref<1x128xf32, #tpu.memory_space<vmem>>, %arg6: memref<128x128xf32, #tpu.memory_space<vmem>>, %arg7: memref<1x128xf32, #tpu.memory_space<vmem>>, %arg8: memref<8x128xf32, #tpu.memory_space<vmem>>) attributes {dimension_semantics = [#tpu.dimension_semantics<arbitrary>], iteration_bounds = array<i64: 1>, scalar_prefetch = 0 : i64, scratch_operands = 0 : i64, tpu.core_type = #tpu.core_type<tc>, window_params = [{pipeline_mode = #tpu.pipeline_mode<synchronous>, transform_indices = @transform_0, window_bounds = array<i64: 8, 8, 1>}, {pipeline_mode = #tpu.pipeline_mode<synchronous>, transform_indices = @transform_1, window_bounds = array<i64: 1, 384>}, {pipeline_mode = #tpu.pipeline_mode<synchronous>, transform_indices = @transform_2, window_bounds = array<i64: 1, 384>}, {pipeline_mode = #tpu.pipeline_mode<synchronous>, transform_indices = @transform_3, window_bounds = array<i64: 128, 384>}, {pipeline_mode = #tpu.pipeline_mode<synchronous>, transform_indices = @transform_4, window_bounds = array<i64: 1, 128>}, {pipeline_mode = #tpu.pipeline_mode<synchronous>, transform_indices = @transform_5, window_bounds = array<i64: 128, 128>}, {pipeline_mode = #tpu.pipeline_mode<synchronous>, transform_indices = @transform_6, window_bounds = array<i64: 1, 128>}, {pipeline_mode = #tpu.pipeline_mode<synchronous>, transform_indices = @transform_7, window_bounds = array<i64: 8, 128>}]} {
    %c0 = arith.constant 0 : index
    %c0_0 = arith.constant 0 : index
    %0 = vector.load %arg2[%c0, %c0_0] : memref<1x384xf32, #tpu.memory_space<vmem>>, vector<1x384xf32>
    %c0_1 = arith.constant 0 : index
    %c0_2 = arith.constant 0 : index
    %1 = vector.load %arg3[%c0_1, %c0_2] : memref<1x384xf32, #tpu.memory_space<vmem>>, vector<1x384xf32>
    %c0_3 = arith.constant 0 : index
    %c0_4 = arith.constant 0 : index
    %2 = vector.load %arg4[%c0_3, %c0_4] : memref<128x384xf32, #tpu.memory_space<vmem>>, vector<128x384xf32>
    %c0_5 = arith.constant 0 : index
    %c0_6 = arith.constant 0 : index
    %3 = vector.load %arg5[%c0_5, %c0_6] : memref<1x128xf32, #tpu.memory_space<vmem>>, vector<1x128xf32>
    %4 = vector.shape_cast %3 : vector<1x128xf32> to vector<1x128xf32>
    %5 = vector.broadcast %4 : vector<1x128xf32> to vector<8x128xf32>
    %cst = arith.constant 0.000000e+00 : f32
    %6 = vector.broadcast %cst : f32 to vector<8x128xf32>
    %c0_i32 = arith.constant 0 : i32
    %7 = arith.index_cast %c0_i32 : i32 to index
    %c0_7 = arith.constant 0 : index
    %c0_8 = arith.constant 0 : index
    %8 = vector.load %arg1[%7, %c0_7, %c0_8] : memref<8x8x1xf32, #tpu.memory_space<vmem>>, vector<1x8x1xf32>
    %9 = vector.shape_cast %8 : vector<1x8x1xf32> to vector<8x1xf32>
    %10 = vector.broadcast %9 : vector<8x1xf32> to vector<8x384xf32>
    %11 = vector.broadcast %0 : vector<1x384xf32> to vector<8x384xf32>
    %12 = arith.mulf %10, %11 : vector<8x384xf32>
    %13 = vector.broadcast %1 : vector<1x384xf32> to vector<8x384xf32>
    %14 = arith.addf %12, %13 : vector<8x384xf32>
    %cst_9 = arith.constant dense<0.000000e+00> : vector<8x384xf32>
    %15 = tpu.matmul %6, %2, %cst_9 {dimension_numbers = #tpu.dot_dimension_numbers<[1], [0], [0], [1], [0, 0, 1, 1], [], []>} : vector<8x128xf32>, vector<128x384xf32>, vector<8x384xf32> -> vector<8x384xf32>
    %16 = vector.extract_strided_slice %14 {offsets = [0, 0], sizes = [8, 128], strides = [1, 1]} : vector<8x384xf32> to vector<8x128xf32>
    %17 = vector.extract_strided_slice %15 {offsets = [0, 0], sizes = [8, 128], strides = [1, 1]} : vector<8x384xf32> to vector<8x128xf32>
    %18 = arith.addf %16, %17 : vector<8x128xf32>
    %19 = arith.negf %18 : vector<8x128xf32>
    %20 = math.exp %19 : vector<8x128xf32>
    %cst_10 = arith.constant 1.000000e+00 : f32
    %21 = vector.broadcast %cst_10 : f32 to vector<8x128xf32>
    %22 = arith.addf %21, %20 : vector<8x128xf32>
    %23 = arith.divf %21, %22 : vector<8x128xf32>
    %24 = vector.extract_strided_slice %14 {offsets = [0, 128], sizes = [8, 128], strides = [1, 1]} : vector<8x384xf32> to vector<8x128xf32>
    %25 = vector.extract_strided_slice %15 {offsets = [0, 128], sizes = [8, 128], strides = [1, 1]} : vector<8x384xf32> to vector<8x128xf32>
    %26 = arith.addf %24, %25 : vector<8x128xf32>
    %27 = arith.negf %26 : vector<8x128xf32>
    %28 = math.exp %27 : vector<8x128xf32>
    %cst_11 = arith.constant 1.000000e+00 : f32
    %29 = vector.broadcast %cst_11 : f32 to vector<8x128xf32>
    %30 = arith.addf %29, %28 : vector<8x128xf32>
    %31 = arith.divf %29, %30 : vector<8x128xf32>
    %32 = vector.extract_strided_slice %14 {offsets = [0, 256], sizes = [8, 128], strides = [1, 1]} : vector<8x384xf32> to vector<8x128xf32>
    %33 = vector.extract_strided_slice %15 {offsets = [0, 256], sizes = [8, 128], strides = [1, 1]} : vector<8x384xf32> to vector<8x128xf32>
    %34 = arith.addf %33, %5 : vector<8x128xf32>
    %35 = arith.mulf %23, %34 : vector<8x128xf32>
    %36 = arith.addf %32, %35 : vector<8x128xf32>
    %37 = math.tanh %36 : vector<8x128xf32>
    %cst_12 = arith.constant 1.000000e+00 : f32
    %38 = vector.broadcast %cst_12 : f32 to vector<8x128xf32>
    %39 = arith.subf %38, %31 : vector<8x128xf32>
    %40 = arith.mulf %39, %37 : vector<8x128xf32>
    %41 = arith.mulf %31, %6 : vector<8x128xf32>
    %42 = arith.addf %40, %41 : vector<8x128xf32>
    %c1_i32 = arith.constant 1 : i32
    %43 = arith.index_cast %c1_i32 : i32 to index
    %c0_13 = arith.constant 0 : index
    %c0_14 = arith.constant 0 : index
    %44 = vector.load %arg1[%43, %c0_13, %c0_14] : memref<8x8x1xf32, #tpu.memory_space<vmem>>, vector<1x8x1xf32>
    %45 = vector.shape_cast %44 : vector<1x8x1xf32> to vector<8x1xf32>
    %46 = vector.broadcast %45 : vector<8x1xf32> to vector<8x384xf32>
    %47 = vector.broadcast %0 : vector<1x384xf32> to vector<8x384xf32>
    %48 = arith.mulf %46, %47 : vector<8x384xf32>
    %49 = vector.broadcast %1 : vector<1x384xf32> to vector<8x384xf32>
    %50 = arith.addf %48, %49 : vector<8x384xf32>
    %cst_15 = arith.constant dense<0.000000e+00> : vector<8x384xf32>
    %51 = tpu.matmul %42, %2, %cst_15 {dimension_numbers = #tpu.dot_dimension_numbers<[1], [0], [0], [1], [0, 0, 1, 1], [], []>} : vector<8x128xf32>, vector<128x384xf32>, vector<8x384xf32> -> vector<8x384xf32>
    %52 = vector.extract_strided_slice %50 {offsets = [0, 0], sizes = [8, 128], strides = [1, 1]} : vector<8x384xf32> to vector<8x128xf32>
    %53 = vector.extract_strided_slice %51 {offsets = [0, 0], sizes = [8, 128], strides = [1, 1]} : vector<8x384xf32> to vector<8x128xf32>
    %54 = arith.addf %52, %53 : vector<8x128xf32>
    %55 = arith.negf %54 : vector<8x128xf32>
    %56 = math.exp %55 : vector<8x128xf32>
    %cst_16 = arith.constant 1.000000e+00 : f32
    %57 = vector.broadcast %cst_16 : f32 to vector<8x128xf32>
    %58 = arith.addf %57, %56 : vector<8x128xf32>
    %59 = arith.divf %57, %58 : vector<8x128xf32>
    %60 = vector.extract_strided_slice %50 {offsets = [0, 128], sizes = [8, 128], strides = [1, 1]} : vector<8x384xf32> to vector<8x128xf32>
    %61 = vector.extract_strided_slice %51 {offsets = [0, 128], sizes = [8, 128], strides = [1, 1]} : vector<8x384xf32> to vector<8x128xf32>
    %62 = arith.addf %60, %61 : vector<8x128xf32>
    %63 = arith.negf %62 : vector<8x128xf32>
    %64 = math.exp %63 : vector<8x128xf32>
    %cst_17 = arith.constant 1.000000e+00 : f32
    %65 = vector.broadcast %cst_17 : f32 to vector<8x128xf32>
    %66 = arith.addf %65, %64 : vector<8x128xf32>
    %67 = arith.divf %65, %66 : vector<8x128xf32>
    %68 = vector.extract_strided_slice %50 {offsets = [0, 256], sizes = [8, 128], strides = [1, 1]} : vector<8x384xf32> to vector<8x128xf32>
    %69 = vector.extract_strided_slice %51 {offsets = [0, 256], sizes = [8, 128], strides = [1, 1]} : vector<8x384xf32> to vector<8x128xf32>
    %70 = arith.addf %69, %5 : vector<8x128xf32>
    %71 = arith.mulf %59, %70 : vector<8x128xf32>
    %72 = arith.addf %68, %71 : vector<8x128xf32>
    %73 = math.tanh %72 : vector<8x128xf32>
    %cst_18 = arith.constant 1.000000e+00 : f32
    %74 = vector.broadcast %cst_18 : f32 to vector<8x128xf32>
    %75 = arith.subf %74, %67 : vector<8x128xf32>
    %76 = arith.mulf %75, %73 : vector<8x128xf32>
    %77 = arith.mulf %67, %42 : vector<8x128xf32>
    %78 = arith.addf %76, %77 : vector<8x128xf32>
    %c2_i32 = arith.constant 2 : i32
    %79 = arith.index_cast %c2_i32 : i32 to index
    %c0_19 = arith.constant 0 : index
    %c0_20 = arith.constant 0 : index
    %80 = vector.load %arg1[%79, %c0_19, %c0_20] : memref<8x8x1xf32, #tpu.memory_space<vmem>>, vector<1x8x1xf32>
    %81 = vector.shape_cast %80 : vector<1x8x1xf32> to vector<8x1xf32>
    %82 = vector.broadcast %81 : vector<8x1xf32> to vector<8x384xf32>
    %83 = vector.broadcast %0 : vector<1x384xf32> to vector<8x384xf32>
    %84 = arith.mulf %82, %83 : vector<8x384xf32>
    %85 = vector.broadcast %1 : vector<1x384xf32> to vector<8x384xf32>
    %86 = arith.addf %84, %85 : vector<8x384xf32>
    %cst_21 = arith.constant dense<0.000000e+00> : vector<8x384xf32>
    %87 = tpu.matmul %78, %2, %cst_21 {dimension_numbers = #tpu.dot_dimension_numbers<[1], [0], [0], [1], [0, 0, 1, 1], [], []>} : vector<8x128xf32>, vector<128x384xf32>, vector<8x384xf32> -> vector<8x384xf32>
    %88 = vector.extract_strided_slice %86 {offsets = [0, 0], sizes = [8, 128], strides = [1, 1]} : vector<8x384xf32> to vector<8x128xf32>
    %89 = vector.extract_strided_slice %87 {offsets = [0, 0], sizes = [8, 128], strides = [1, 1]} : vector<8x384xf32> to vector<8x128xf32>
    %90 = arith.addf %88, %89 : vector<8x128xf32>
    %91 = arith.negf %90 : vector<8x128xf32>
    %92 = math.exp %91 : vector<8x128xf32>
    %cst_22 = arith.constant 1.000000e+00 : f32
    %93 = vector.broadcast %cst_22 : f32 to vector<8x128xf32>
    %94 = arith.addf %93, %92 : vector<8x128xf32>
    %95 = arith.divf %93, %94 : vector<8x128xf32>
    %96 = vector.extract_strided_slice %86 {offsets = [0, 128], sizes = [8, 128], strides = [1, 1]} : vector<8x384xf32> to vector<8x128xf32>
    %97 = vector.extract_strided_slice %87 {offsets = [0, 128], sizes = [8, 128], strides = [1, 1]} : vector<8x384xf32> to vector<8x128xf32>
    %98 = arith.addf %96, %97 : vector<8x128xf32>
    %99 = arith.negf %98 : vector<8x128xf32>
    %100 = math.exp %99 : vector<8x128xf32>
    %cst_23 = arith.constant 1.000000e+00 : f32
    %101 = vector.broadcast %cst_23 : f32 to vector<8x128xf32>
    %102 = arith.addf %101, %100 : vector<8x128xf32>
    %103 = arith.divf %101, %102 : vector<8x128xf32>
    %104 = vector.extract_strided_slice %86 {offsets = [0, 256], sizes = [8, 128], strides = [1, 1]} : vector<8x384xf32> to vector<8x128xf32>
    %105 = vector.extract_strided_slice %87 {offsets = [0, 256], sizes = [8, 128], strides = [1, 1]} : vector<8x384xf32> to vector<8x128xf32>
    %106 = arith.addf %105, %5 : vector<8x128xf32>
    %107 = arith.mulf %95, %106 : vector<8x128xf32>
    %108 = arith.addf %104, %107 : vector<8x128xf32>
    %109 = math.tanh %108 : vector<8x128xf32>
    %cst_24 = arith.constant 1.000000e+00 : f32
    %110 = vector.broadcast %cst_24 : f32 to vector<8x128xf32>
    %111 = arith.subf %110, %103 : vector<8x128xf32>
    %112 = arith.mulf %111, %109 : vector<8x128xf32>
    %113 = arith.mulf %103, %78 : vector<8x128xf32>
    %114 = arith.addf %112, %113 : vector<8x128xf32>
    %c3_i32 = arith.constant 3 : i32
    %115 = arith.index_cast %c3_i32 : i32 to index
    %c0_25 = arith.constant 0 : index
    %c0_26 = arith.constant 0 : index
    %116 = vector.load %arg1[%115, %c0_25, %c0_26] : memref<8x8x1xf32, #tpu.memory_space<vmem>>, vector<1x8x1xf32>
    %117 = vector.shape_cast %116 : vector<1x8x1xf32> to vector<8x1xf32>
    %118 = vector.broadcast %117 : vector<8x1xf32> to vector<8x384xf32>
    %119 = vector.broadcast %0 : vector<1x384xf32> to vector<8x384xf32>
    %120 = arith.mulf %118, %119 : vector<8x384xf32>
    %121 = vector.broadcast %1 : vector<1x384xf32> to vector<8x384xf32>
    %122 = arith.addf %120, %121 : vector<8x384xf32>
    %cst_27 = arith.constant dense<0.000000e+00> : vector<8x384xf32>
    %123 = tpu.matmul %114, %2, %cst_27 {dimension_numbers = #tpu.dot_dimension_numbers<[1], [0], [0], [1], [0, 0, 1, 1], [], []>} : vector<8x128xf32>, vector<128x384xf32>, vector<8x384xf32> -> vector<8x384xf32>
    %124 = vector.extract_strided_slice %122 {offsets = [0, 0], sizes = [8, 128], strides = [1, 1]} : vector<8x384xf32> to vector<8x128xf32>
    %125 = vector.extract_strided_slice %123 {offsets = [0, 0], sizes = [8, 128], strides = [1, 1]} : vector<8x384xf32> to vector<8x128xf32>
    %126 = arith.addf %124, %125 : vector<8x128xf32>
    %127 = arith.negf %126 : vector<8x128xf32>
    %128 = math.exp %127 : vector<8x128xf32>
    %cst_28 = arith.constant 1.000000e+00 : f32
    %129 = vector.broadcast %cst_28 : f32 to vector<8x128xf32>
    %130 = arith.addf %129, %128 : vector<8x128xf32>
    %131 = arith.divf %129, %130 : vector<8x128xf32>
    %132 = vector.extract_strided_slice %122 {offsets = [0, 128], sizes = [8, 128], strides = [1, 1]} : vector<8x384xf32> to vector<8x128xf32>
    %133 = vector.extract_strided_slice %123 {offsets = [0, 128], sizes = [8, 128], strides = [1, 1]} : vector<8x384xf32> to vector<8x128xf32>
    %134 = arith.addf %132, %133 : vector<8x128xf32>
    %135 = arith.negf %134 : vector<8x128xf32>
    %136 = math.exp %135 : vector<8x128xf32>
    %cst_29 = arith.constant 1.000000e+00 : f32
    %137 = vector.broadcast %cst_29 : f32 to vector<8x128xf32>
    %138 = arith.addf %137, %136 : vector<8x128xf32>
    %139 = arith.divf %137, %138 : vector<8x128xf32>
    %140 = vector.extract_strided_slice %122 {offsets = [0, 256], sizes = [8, 128], strides = [1, 1]} : vector<8x384xf32> to vector<8x128xf32>
    %141 = vector.extract_strided_slice %123 {offsets = [0, 256], sizes = [8, 128], strides = [1, 1]} : vector<8x384xf32> to vector<8x128xf32>
    %142 = arith.addf %141, %5 : vector<8x128xf32>
    %143 = arith.mulf %131, %142 : vector<8x128xf32>
    %144 = arith.addf %140, %143 : vector<8x128xf32>
    %145 = math.tanh %144 : vector<8x128xf32>
    %cst_30 = arith.constant 1.000000e+00 : f32
    %146 = vector.broadcast %cst_30 : f32 to vector<8x128xf32>
    %147 = arith.subf %146, %139 : vector<8x128xf32>
    %148 = arith.mulf %147, %145 : vector<8x128xf32>
    %149 = arith.mulf %139, %114 : vector<8x128xf32>
    %150 = arith.addf %148, %149 : vector<8x128xf32>
    %c4_i32 = arith.constant 4 : i32
    %151 = arith.index_cast %c4_i32 : i32 to index
    %c0_31 = arith.constant 0 : index
    %c0_32 = arith.constant 0 : index
    %152 = vector.load %arg1[%151, %c0_31, %c0_32] : memref<8x8x1xf32, #tpu.memory_space<vmem>>, vector<1x8x1xf32>
    %153 = vector.shape_cast %152 : vector<1x8x1xf32> to vector<8x1xf32>
    %154 = vector.broadcast %153 : vector<8x1xf32> to vector<8x384xf32>
    %155 = vector.broadcast %0 : vector<1x384xf32> to vector<8x384xf32>
    %156 = arith.mulf %154, %155 : vector<8x384xf32>
    %157 = vector.broadcast %1 : vector<1x384xf32> to vector<8x384xf32>
    %158 = arith.addf %156, %157 : vector<8x384xf32>
    %cst_33 = arith.constant dense<0.000000e+00> : vector<8x384xf32>
    %159 = tpu.matmul %150, %2, %cst_33 {dimension_numbers = #tpu.dot_dimension_numbers<[1], [0], [0], [1], [0, 0, 1, 1], [], []>} : vector<8x128xf32>, vector<128x384xf32>, vector<8x384xf32> -> vector<8x384xf32>
    %160 = vector.extract_strided_slice %158 {offsets = [0, 0], sizes = [8, 128], strides = [1, 1]} : vector<8x384xf32> to vector<8x128xf32>
    %161 = vector.extract_strided_slice %159 {offsets = [0, 0], sizes = [8, 128], strides = [1, 1]} : vector<8x384xf32> to vector<8x128xf32>
    %162 = arith.addf %160, %161 : vector<8x128xf32>
    %163 = arith.negf %162 : vector<8x128xf32>
    %164 = math.exp %163 : vector<8x128xf32>
    %cst_34 = arith.constant 1.000000e+00 : f32
    %165 = vector.broadcast %cst_34 : f32 to vector<8x128xf32>
    %166 = arith.addf %165, %164 : vector<8x128xf32>
    %167 = arith.divf %165, %166 : vector<8x128xf32>
    %168 = vector.extract_strided_slice %158 {offsets = [0, 128], sizes = [8, 128], strides = [1, 1]} : vector<8x384xf32> to vector<8x128xf32>
    %169 = vector.extract_strided_slice %159 {offsets = [0, 128], sizes = [8, 128], strides = [1, 1]} : vector<8x384xf32> to vector<8x128xf32>
    %170 = arith.addf %168, %169 : vector<8x128xf32>
    %171 = arith.negf %170 : vector<8x128xf32>
    %172 = math.exp %171 : vector<8x128xf32>
    %cst_35 = arith.constant 1.000000e+00 : f32
    %173 = vector.broadcast %cst_35 : f32 to vector<8x128xf32>
    %174 = arith.addf %173, %172 : vector<8x128xf32>
    %175 = arith.divf %173, %174 : vector<8x128xf32>
    %176 = vector.extract_strided_slice %158 {offsets = [0, 256], sizes = [8, 128], strides = [1, 1]} : vector<8x384xf32> to vector<8x128xf32>
    %177 = vector.extract_strided_slice %159 {offsets = [0, 256], sizes = [8, 128], strides = [1, 1]} : vector<8x384xf32> to vector<8x128xf32>
    %178 = arith.addf %177, %5 : vector<8x128xf32>
    %179 = arith.mulf %167, %178 : vector<8x128xf32>
    %180 = arith.addf %176, %179 : vector<8x128xf32>
    %181 = math.tanh %180 : vector<8x128xf32>
    %cst_36 = arith.constant 1.000000e+00 : f32
    %182 = vector.broadcast %cst_36 : f32 to vector<8x128xf32>
    %183 = arith.subf %182, %175 : vector<8x128xf32>
    %184 = arith.mulf %183, %181 : vector<8x128xf32>
    %185 = arith.mulf %175, %150 : vector<8x128xf32>
    %186 = arith.addf %184, %185 : vector<8x128xf32>
    %c5_i32 = arith.constant 5 : i32
    %187 = arith.index_cast %c5_i32 : i32 to index
    %c0_37 = arith.constant 0 : index
    %c0_38 = arith.constant 0 : index
    %188 = vector.load %arg1[%187, %c0_37, %c0_38] : memref<8x8x1xf32, #tpu.memory_space<vmem>>, vector<1x8x1xf32>
    %189 = vector.shape_cast %188 : vector<1x8x1xf32> to vector<8x1xf32>
    %190 = vector.broadcast %189 : vector<8x1xf32> to vector<8x384xf32>
    %191 = vector.broadcast %0 : vector<1x384xf32> to vector<8x384xf32>
    %192 = arith.mulf %190, %191 : vector<8x384xf32>
    %193 = vector.broadcast %1 : vector<1x384xf32> to vector<8x384xf32>
    %194 = arith.addf %192, %193 : vector<8x384xf32>
    %cst_39 = arith.constant dense<0.000000e+00> : vector<8x384xf32>
    %195 = tpu.matmul %186, %2, %cst_39 {dimension_numbers = #tpu.dot_dimension_numbers<[1], [0], [0], [1], [0, 0, 1, 1], [], []>} : vector<8x128xf32>, vector<128x384xf32>, vector<8x384xf32> -> vector<8x384xf32>
    %196 = vector.extract_strided_slice %194 {offsets = [0, 0], sizes = [8, 128], strides = [1, 1]} : vector<8x384xf32> to vector<8x128xf32>
    %197 = vector.extract_strided_slice %195 {offsets = [0, 0], sizes = [8, 128], strides = [1, 1]} : vector<8x384xf32> to vector<8x128xf32>
    %198 = arith.addf %196, %197 : vector<8x128xf32>
    %199 = arith.negf %198 : vector<8x128xf32>
    %200 = math.exp %199 : vector<8x128xf32>
    %cst_40 = arith.constant 1.000000e+00 : f32
    %201 = vector.broadcast %cst_40 : f32 to vector<8x128xf32>
    %202 = arith.addf %201, %200 : vector<8x128xf32>
    %203 = arith.divf %201, %202 : vector<8x128xf32>
    %204 = vector.extract_strided_slice %194 {offsets = [0, 128], sizes = [8, 128], strides = [1, 1]} : vector<8x384xf32> to vector<8x128xf32>
    %205 = vector.extract_strided_slice %195 {offsets = [0, 128], sizes = [8, 128], strides = [1, 1]} : vector<8x384xf32> to vector<8x128xf32>
    %206 = arith.addf %204, %205 : vector<8x128xf32>
    %207 = arith.negf %206 : vector<8x128xf32>
    %208 = math.exp %207 : vector<8x128xf32>
    %cst_41 = arith.constant 1.000000e+00 : f32
    %209 = vector.broadcast %cst_41 : f32 to vector<8x128xf32>
    %210 = arith.addf %209, %208 : vector<8x128xf32>
    %211 = arith.divf %209, %210 : vector<8x128xf32>
    %212 = vector.extract_strided_slice %194 {offsets = [0, 256], sizes = [8, 128], strides = [1, 1]} : vector<8x384xf32> to vector<8x128xf32>
    %213 = vector.extract_strided_slice %195 {offsets = [0, 256], sizes = [8, 128], strides = [1, 1]} : vector<8x384xf32> to vector<8x128xf32>
    %214 = arith.addf %213, %5 : vector<8x128xf32>
    %215 = arith.mulf %203, %214 : vector<8x128xf32>
    %216 = arith.addf %212, %215 : vector<8x128xf32>
    %217 = math.tanh %216 : vector<8x128xf32>
    %cst_42 = arith.constant 1.000000e+00 : f32
    %218 = vector.broadcast %cst_42 : f32 to vector<8x128xf32>
    %219 = arith.subf %218, %211 : vector<8x128xf32>
    %220 = arith.mulf %219, %217 : vector<8x128xf32>
    %221 = arith.mulf %211, %186 : vector<8x128xf32>
    %222 = arith.addf %220, %221 : vector<8x128xf32>
    %c6_i32 = arith.constant 6 : i32
    %223 = arith.index_cast %c6_i32 : i32 to index
    %c0_43 = arith.constant 0 : index
    %c0_44 = arith.constant 0 : index
    %224 = vector.load %arg1[%223, %c0_43, %c0_44] : memref<8x8x1xf32, #tpu.memory_space<vmem>>, vector<1x8x1xf32>
    %225 = vector.shape_cast %224 : vector<1x8x1xf32> to vector<8x1xf32>
    %226 = vector.broadcast %225 : vector<8x1xf32> to vector<8x384xf32>
    %227 = vector.broadcast %0 : vector<1x384xf32> to vector<8x384xf32>
    %228 = arith.mulf %226, %227 : vector<8x384xf32>
    %229 = vector.broadcast %1 : vector<1x384xf32> to vector<8x384xf32>
    %230 = arith.addf %228, %229 : vector<8x384xf32>
    %cst_45 = arith.constant dense<0.000000e+00> : vector<8x384xf32>
    %231 = tpu.matmul %222, %2, %cst_45 {dimension_numbers = #tpu.dot_dimension_numbers<[1], [0], [0], [1], [0, 0, 1, 1], [], []>} : vector<8x128xf32>, vector<128x384xf32>, vector<8x384xf32> -> vector<8x384xf32>
    %232 = vector.extract_strided_slice %230 {offsets = [0, 0], sizes = [8, 128], strides = [1, 1]} : vector<8x384xf32> to vector<8x128xf32>
    %233 = vector.extract_strided_slice %231 {offsets = [0, 0], sizes = [8, 128], strides = [1, 1]} : vector<8x384xf32> to vector<8x128xf32>
    %234 = arith.addf %232, %233 : vector<8x128xf32>
    %235 = arith.negf %234 : vector<8x128xf32>
    %236 = math.exp %235 : vector<8x128xf32>
    %cst_46 = arith.constant 1.000000e+00 : f32
    %237 = vector.broadcast %cst_46 : f32 to vector<8x128xf32>
    %238 = arith.addf %237, %236 : vector<8x128xf32>
    %239 = arith.divf %237, %238 : vector<8x128xf32>
    %240 = vector.extract_strided_slice %230 {offsets = [0, 128], sizes = [8, 128], strides = [1, 1]} : vector<8x384xf32> to vector<8x128xf32>
    %241 = vector.extract_strided_slice %231 {offsets = [0, 128], sizes = [8, 128], strides = [1, 1]} : vector<8x384xf32> to vector<8x128xf32>
    %242 = arith.addf %240, %241 : vector<8x128xf32>
    %243 = arith.negf %242 : vector<8x128xf32>
    %244 = math.exp %243 : vector<8x128xf32>
    %cst_47 = arith.constant 1.000000e+00 : f32
    %245 = vector.broadcast %cst_47 : f32 to vector<8x128xf32>
    %246 = arith.addf %245, %244 : vector<8x128xf32>
    %247 = arith.divf %245, %246 : vector<8x128xf32>
    %248 = vector.extract_strided_slice %230 {offsets = [0, 256], sizes = [8, 128], strides = [1, 1]} : vector<8x384xf32> to vector<8x128xf32>
    %249 = vector.extract_strided_slice %231 {offsets = [0, 256], sizes = [8, 128], strides = [1, 1]} : vector<8x384xf32> to vector<8x128xf32>
    %250 = arith.addf %249, %5 : vector<8x128xf32>
    %251 = arith.mulf %239, %250 : vector<8x128xf32>
    %252 = arith.addf %248, %251 : vector<8x128xf32>
    %253 = math.tanh %252 : vector<8x128xf32>
    %cst_48 = arith.constant 1.000000e+00 : f32
    %254 = vector.broadcast %cst_48 : f32 to vector<8x128xf32>
    %255 = arith.subf %254, %247 : vector<8x128xf32>
    %256 = arith.mulf %255, %253 : vector<8x128xf32>
    %257 = arith.mulf %247, %222 : vector<8x128xf32>
    %258 = arith.addf %256, %257 : vector<8x128xf32>
    %c7_i32 = arith.constant 7 : i32
    %259 = arith.index_cast %c7_i32 : i32 to index
    %c0_49 = arith.constant 0 : index
    %c0_50 = arith.constant 0 : index
    %260 = vector.load %arg1[%259, %c0_49, %c0_50] : memref<8x8x1xf32, #tpu.memory_space<vmem>>, vector<1x8x1xf32>
    %261 = vector.shape_cast %260 : vector<1x8x1xf32> to vector<8x1xf32>
    %262 = vector.broadcast %261 : vector<8x1xf32> to vector<8x384xf32>
    %263 = vector.broadcast %0 : vector<1x384xf32> to vector<8x384xf32>
    %264 = arith.mulf %262, %263 : vector<8x384xf32>
    %265 = vector.broadcast %1 : vector<1x384xf32> to vector<8x384xf32>
    %266 = arith.addf %264, %265 : vector<8x384xf32>
    %cst_51 = arith.constant dense<0.000000e+00> : vector<8x384xf32>
    %267 = tpu.matmul %258, %2, %cst_51 {dimension_numbers = #tpu.dot_dimension_numbers<[1], [0], [0], [1], [0, 0, 1, 1], [], []>} : vector<8x128xf32>, vector<128x384xf32>, vector<8x384xf32> -> vector<8x384xf32>
    %268 = vector.extract_strided_slice %266 {offsets = [0, 0], sizes = [8, 128], strides = [1, 1]} : vector<8x384xf32> to vector<8x128xf32>
    %269 = vector.extract_strided_slice %267 {offsets = [0, 0], sizes = [8, 128], strides = [1, 1]} : vector<8x384xf32> to vector<8x128xf32>
    %270 = arith.addf %268, %269 : vector<8x128xf32>
    %271 = arith.negf %270 : vector<8x128xf32>
    %272 = math.exp %271 : vector<8x128xf32>
    %cst_52 = arith.constant 1.000000e+00 : f32
    %273 = vector.broadcast %cst_52 : f32 to vector<8x128xf32>
    %274 = arith.addf %273, %272 : vector<8x128xf32>
    %275 = arith.divf %273, %274 : vector<8x128xf32>
    %276 = vector.extract_strided_slice %266 {offsets = [0, 128], sizes = [8, 128], strides = [1, 1]} : vector<8x384xf32> to vector<8x128xf32>
    %277 = vector.extract_strided_slice %267 {offsets = [0, 128], sizes = [8, 128], strides = [1, 1]} : vector<8x384xf32> to vector<8x128xf32>
    %278 = arith.addf %276, %277 : vector<8x128xf32>
    %279 = arith.negf %278 : vector<8x128xf32>
    %280 = math.exp %279 : vector<8x128xf32>
    %cst_53 = arith.constant 1.000000e+00 : f32
    %281 = vector.broadcast %cst_53 : f32 to vector<8x128xf32>
    %282 = arith.addf %281, %280 : vector<8x128xf32>
    %283 = arith.divf %281, %282 : vector<8x128xf32>
    %284 = vector.extract_strided_slice %266 {offsets = [0, 256], sizes = [8, 128], strides = [1, 1]} : vector<8x384xf32> to vector<8x128xf32>
    %285 = vector.extract_strided_slice %267 {offsets = [0, 256], sizes = [8, 128], strides = [1, 1]} : vector<8x384xf32> to vector<8x128xf32>
    %286 = arith.addf %285, %5 : vector<8x128xf32>
    %287 = arith.mulf %275, %286 : vector<8x128xf32>
    %288 = arith.addf %284, %287 : vector<8x128xf32>
    %289 = math.tanh %288 : vector<8x128xf32>
    %cst_54 = arith.constant 1.000000e+00 : f32
    %290 = vector.broadcast %cst_54 : f32 to vector<8x128xf32>
    %291 = arith.subf %290, %283 : vector<8x128xf32>
    %292 = arith.mulf %291, %289 : vector<8x128xf32>
    %293 = arith.mulf %283, %258 : vector<8x128xf32>
    %294 = arith.addf %292, %293 : vector<8x128xf32>
    %c8_i32 = arith.constant 8 : i32
    %c0_55 = arith.constant 0 : index
    %c0_56 = arith.constant 0 : index
    %295 = vector.load %arg6[%c0_55, %c0_56] : memref<128x128xf32, #tpu.memory_space<vmem>>, vector<128x128xf32>
    %cst_57 = arith.constant dense<0.000000e+00> : vector<8x128xf32>
    %296 = tpu.matmul %294, %295, %cst_57 {dimension_numbers = #tpu.dot_dimension_numbers<[1], [0], [0], [1], [0, 0, 1, 1], [], []>} : vector<8x128xf32>, vector<128x128xf32>, vector<8x128xf32> -> vector<8x128xf32>
    %c0_58 = arith.constant 0 : index
    %c0_59 = arith.constant 0 : index
    %297 = vector.load %arg7[%c0_58, %c0_59] : memref<1x128xf32, #tpu.memory_space<vmem>>, vector<1x128xf32>
    %298 = vector.broadcast %297 : vector<1x128xf32> to vector<8x128xf32>
    %299 = arith.addf %296, %298 : vector<8x128xf32>
    %c0_60 = arith.constant 0 : index
    %c0_61 = arith.constant 0 : index
    %300 = vector.load %arg8[%c0_60, %c0_61] : memref<8x128xf32, #tpu.memory_space<vmem>>, vector<8x128xf32>
    tpu.vector_store %arg8[%c0_60, %c0_61], %299 {strides = array<i32>} : memref<8x128xf32, #tpu.memory_space<vmem>>, vector<8x128xf32>,
    return
  }
  func.func @transform_0(%arg0: i32) -> (i32, i32, i32) {
    %c0_i32 = arith.constant 0 : i32
    %c0_i32_0 = arith.constant 0 : i32
    %c0_i32_1 = arith.constant 0 : i32
    %c0_i32_2 = arith.constant 0 : i32
    return %c0_i32, %c0_i32_0, %c0_i32_1 : i32, i32, i32
  }
  func.func @transform_1(%arg0: i32) -> (i32, i32) {
    %c0_i32 = arith.constant 0 : i32
    %c0_i32_0 = arith.constant 0 : i32
    %c0_i32_1 = arith.constant 0 : i32
    return %c0_i32, %c0_i32_0 : i32, i32
  }
  func.func @transform_2(%arg0: i32) -> (i32, i32) {
    %c0_i32 = arith.constant 0 : i32
    %c0_i32_0 = arith.constant 0 : i32
    %c0_i32_1 = arith.constant 0 : i32
    return %c0_i32, %c0_i32_0 : i32, i32
  }
  func.func @transform_3(%arg0: i32) -> (i32, i32) {
    %c0_i32 = arith.constant 0 : i32
    %c0_i32_0 = arith.constant 0 : i32
    %c0_i32_1 = arith.constant 0 : i32
    return %c0_i32, %c0_i32_0 : i32, i32
  }
  func.func @transform_4(%arg0: i32) -> (i32, i32) {
    %c0_i32 = arith.constant 0 : i32
    %c0_i32_0 = arith.constant 0 : i32
    %c0_i32_1 = arith.constant 0 : i32
    return %c0_i32, %c0_i32_0 : i32, i32
  }
  func.func @transform_5(%arg0: i32) -> (i32, i32) {
    %c0_i32 = arith.constant 0 : i32
    %c0_i32_0 = arith.constant 0 : i32
    %c0_i32_1 = arith.constant 0 : i32
    return %c0_i32, %c0_i32_0 : i32, i32
  }
  func.func @transform_6(%arg0: i32) -> (i32, i32) {
    %c0_i32 = arith.constant 0 : i32
    %c0_i32_0 = arith.constant 0 : i32
    %c0_i32_1 = arith.constant 0 : i32
    return %c0_i32, %c0_i32_0 : i32, i32
  }
  func.func @transform_7(%arg0: i32) -> (i32, i32) {
    %c0_i32 = arith.constant 0 : i32
    %c0_i32_0 = arith.constant 0 : i32
    %c0_i32_1 = arith.constant 0 : i32
    return %c0_i32, %c0_i32_0 : i32, i32
  }
}

</mosaic_0001>

<llo_original>
// kernel: tpu_custom_call.1
$region0: #{tpu_custom_call.1}
  #allocation0 [shape = 'u32[]', space=smem, size = 0x4, offset = 0x4, fixed_abs, tag = 'smem constant byte address 0x4 - core index']
  #allocation1 [shape = 'u32[144,128]{1,0:T(1,128)}', space=vmem, size = 0x12000, scoped, tag = 'internal scratch']
  %s0 = inlined_call_operand.vmem [shape: f32[8,8,1], index: 0, kind: input, shape index: {}]
  %s1 = inlined_call_operand.vmem [shape: f32[1,384], index: 1, kind: input, shape index: {}]
  %s2 = inlined_call_operand.vmem [shape: f32[1,384], index: 2, kind: input, shape index: {}]
  %s3 = inlined_call_operand.hbm [shape: f32[128,384], index: 3, kind: input, shape index: {}]
  %s4 = inlined_call_operand.vmem [shape: f32[1,128], index: 4, kind: input, shape index: {}]
  %s5 = inlined_call_operand.hbm [shape: f32[128,128], index: 5, kind: input, shape index: {}]
  %s6 = inlined_call_operand.vmem [shape: f32[1,128], index: 6, kind: input, shape index: {}]
  %s7 = inlined_call_operand.hbm [shape: f32[8,128], index: 7, kind: output, shape index: {}]
  %s8 = sld [smem:[#allocation0]]
  $region46: #{tpu_custom_call.1} parent=0
    _
  %s10 = ssub.s32 1, %s8
  %s11 = scalar_select 0, %s10, %s8
  $region1: #{tpu_custom_call.1} parent=0
    #allocation2 [shape = 'u8[196608]{0}', space=vmem, size = 0x30000, scoped, tag = 'input window, operand 3, single buffered']
    #allocation3 [shape = 's32[1]{0}', space=sflag, size = 0x4, scoped, tag = 'scoped memory for tpu_custom_call.1']
    #allocation4 [shape = 's32[1]{0}', space=sflag, size = 0x4, scoped, tag = 'scoped memory for tpu_custom_call.1']
    #allocation5 [shape = 'u8[65536]{0}', space=vmem, size = 0x10000, scoped, tag = 'input window, operand 5, single buffered']
    #allocation6 [shape = 's32[1]{0}', space=sflag, size = 0x4, scoped, tag = 'scoped memory for tpu_custom_call.1']
    #allocation7 [shape = 'u8[4096]{0}', space=vmem, size = 0x1000, scoped, tag = 'output window, operand 0, single buffered']
    %12 = vsyncpa [#allocation3], 0
    %13 = vsyncpa [#allocation6], 0
    %14 = vsyncpa [#allocation4], 0
    // Predicated region
    $region2: #{tpu_custom_call.1} parent=1 // pred_check
      _
    $region3: #{tpu_custom_call.1} parent=1 // pred_check_branch
      %16 = sbr.rel (0) target = $region5
    $region4: #{tpu_custom_call.1} parent=1 // pred_region
      _
    $region5: #{tpu_custom_call.1} parent=1 // pred_fallthru
      _
    // Predicated region
    $region6: #{tpu_custom_call.1} parent=1 // pred_check
      _
    $region7: #{tpu_custom_call.1} parent=1 // pred_check_branch
      %18 = sbr.rel (0) target = $region9
    $region8: #{tpu_custom_call.1} parent=1 // pred_region
      _
    $region9: #{tpu_custom_call.1} parent=1 // pred_fallthru
      _
    // Predicated region
    $region10: #{tpu_custom_call.1} parent=1 // pred_check
      _
    $region11: #{tpu_custom_call.1} parent=1 // pred_check_branch
      %20 = sbr.rel (0) target = $region13
    $region12: #{tpu_custom_call.1} parent=1 // pred_region
      _
    $region13: #{tpu_custom_call.1} parent=1 // pred_fallthru
      _
    // Predicated region
    $region14: #{tpu_custom_call.1} parent=1 // pred_check
      _
    $region15: #{tpu_custom_call.1} parent=1 // pred_check_branch
      %22 = sbr.rel (0) target = $region17
    $region16: #{tpu_custom_call.1} parent=1 // pred_region
      %s24 = ssub.s32 6144, 6144
      %25 = vsyncadd [#allocation3], %s24
      %s26 = sshll.u32 [#allocation2], 4
      %s27 = int_to_ptr.vmem [resolvable:$true] %s26
      %32 = dma.hbm_to_vmem [thread:$0]  %s3, 6144, %s27, [#allocation3], 384, 384, 24
    $region17: #{tpu_custom_call.1} parent=1 // pred_fallthru
      _
    // Predicated region
    $region18: #{tpu_custom_call.1} parent=1 // pred_check
      _
    $region19: #{tpu_custom_call.1} parent=1 // pred_check_branch
      %34 = sbr.rel (0) target = $region21
    $region20: #{tpu_custom_call.1} parent=1 // pred_region
      _
    $region21: #{tpu_custom_call.1} parent=1 // pred_fallthru
      _
    // Predicated region
    $region22: #{tpu_custom_call.1} parent=1 // pred_check
      _
    $region23: #{tpu_custom_call.1} parent=1 // pred_check_branch
      %36 = sbr.rel (0) target = $region25
    $region24: #{tpu_custom_call.1} parent=1 // pred_region
      %s38 = ssub.s32 2048, 2048
      %39 = vsyncadd [#allocation6], %s38
      %s40 = sshll.u32 [#allocation5], 4
      %s41 = int_to_ptr.vmem [resolvable:$true] %s40
      %46 = dma.hbm_to_vmem [thread:$0]  %s5, 2048, %s41, [#allocation6], 128, 128, 8
    $region25: #{tpu_custom_call.1} parent=1 // pred_fallthru
      _
    // Predicated region
    $region26: #{tpu_custom_call.1} parent=1 // pred_check
      _
    $region27: #{tpu_custom_call.1} parent=1 // pred_check_branch
      %48 = sbr.rel (0) target = $region29
    $region28: #{tpu_custom_call.1} parent=1 // pred_region
      _
    $region29: #{tpu_custom_call.1} parent=1 // pred_fallthru
      _
    // Predicated region
    $region30: #{tpu_custom_call.1} parent=1 // pred_check
      _
    $region31: #{tpu_custom_call.1} parent=1 // pred_check_branch
      %50 = sbr.rel (0) target = $region33
    $region32: #{tpu_custom_call.1} parent=1 // pred_region
      %51 = dma.done [#allocation3], 6144
    $region33: #{tpu_custom_call.1} parent=1 // pred_fallthru
      _
    // Predicated region
    $region34: #{tpu_custom_call.1} parent=1 // pred_check
      _
    $region35: #{tpu_custom_call.1} parent=1 // pred_check_branch
      %53 = sbr.rel (0) target = $region37
    $region36: #{tpu_custom_call.1} parent=1 // pred_region
      %54 = dma.done [#allocation6], 2048
    $region37: #{tpu_custom_call.1} parent=1 // pred_fallthru
      _
    %v55 = vld [vmem:[%s1] sm:$0x7]
    %v56 = vld [vmem:[%s2] sm:$0x7]
    %v57 = vld [vmem:[#allocation2] sm:$0xff]
    %v58 = vld [vmem:[#allocation2 + $0x8] sm:$0xff]
    %v59 = vld [vmem:[#allocation2 + $0x10] sm:$0xff]
    %v60 = vld [vmem:[#allocation2 + $0x18] sm:$0xff]
    %v61 = vld [vmem:[#allocation2 + $0x20] sm:$0xff]
    %v62 = vld [vmem:[#allocation2 + $0x28] sm:$0xff]
    %v63 = vld [vmem:[#allocation2 + $0x30] sm:$0xff]
    %v64 = vld [vmem:[#allocation2 + $0x38] sm:$0xff]
    %v65 = vld [vmem:[#allocation2 + $0x40] sm:$0xff]
    %v66 = vld [vmem:[#allocation2 + $0x48] sm:$0xff]
    %v67 = vld [vmem:[#allocation2 + $0x50] sm:$0xff]
    %v68 = vld [vmem:[#allocation2 + $0x58] sm:$0xff]
    %v69 = vld [vmem:[#allocation2 + $0x60] sm:$0xff]
    %v70 = vld [vmem:[#allocation2 + $0x68] sm:$0xff]
    %v71 = vld [vmem:[#allocation2 + $0x70] sm:$0xff]
    %v72 = vld [vmem:[#allocation2 + $0x78] sm:$0xff]
    %v73 = vld [vmem:[#allocation2 + $0x80] sm:$0xff]
    %v74 = vld [vmem:[#allocation2 + $0x88] sm:$0xff]
    %v75 = vld [vmem:[#allocation2 + $0x90] sm:$0xff]
    %v76 = vld [vmem:[#allocation2 + $0x98] sm:$0xff]
    %v77 = vld [vmem:[#allocation2 + $0xa0] sm:$0xff]
    %v78 = vld [vmem:[#allocation2 + $0xa8] sm:$0xff]
    %v79 = vld [vmem:[#allocation2 + $0xb0] sm:$0xff]
    %v80 = vld [vmem:[#allocation2 + $0xb8] sm:$0xff]
    %v81 = vld [vmem:[#allocation2 + $0xc0] sm:$0xff]
    %v82 = vld [vmem:[#allocation2 + $0xc8] sm:$0xff]
    %v83 = vld [vmem:[#allocation2 + $0xd0] sm:$0xff]
    %v84 = vld [vmem:[#allocation2 + $0xd8] sm:$0xff]
    %v85 = vld [vmem:[#allocation2 + $0xe0] sm:$0xff]
    %v86 = vld [vmem:[#allocation2 + $0xe8] sm:$0xff]
    %v87 = vld [vmem:[#allocation2 + $0xf0] sm:$0xff]
    %v88 = vld [vmem:[#allocation2 + $0xf8] sm:$0xff]
    %v89 = vld [vmem:[#allocation2 + $0x100] sm:$0xff]
    %v90 = vld [vmem:[#allocation2 + $0x108] sm:$0xff]
    %v91 = vld [vmem:[#allocation2 + $0x110] sm:$0xff]
    %v92 = vld [vmem:[#allocation2 + $0x118] sm:$0xff]
    %v93 = vld [vmem:[#allocation2 + $0x120] sm:$0xff]
    %v94 = vld [vmem:[#allocation2 + $0x128] sm:$0xff]
    %v95 = vld [vmem:[#allocation2 + $0x130] sm:$0xff]
    %v96 = vld [vmem:[#allocation2 + $0x138] sm:$0xff]
    %v97 = vld [vmem:[#allocation2 + $0x140] sm:$0xff]
    %v98 = vld [vmem:[#allocation2 + $0x148] sm:$0xff]
    %v99 = vld [vmem:[#allocation2 + $0x150] sm:$0xff]
    %v100 = vld [vmem:[#allocation2 + $0x158] sm:$0xff]
    %v101 = vld [vmem:[#allocation2 + $0x160] sm:$0xff]
    %v102 = vld [vmem:[#allocation2 + $0x168] sm:$0xff]
    %v103 = vld [vmem:[#allocation2 + $0x170] sm:$0xff]
    %v104 = vld [vmem:[#allocation2 + $0x178] sm:$0xff]
    %v105 = vld [vmem:[%s4] sm:$0x1]
    %v107 = vlaneseq
    %v108 = vshrl.u32 %v107, 7
    %v109 = vsub.s32 0, %v108
    %v110 = vrot.slane %v105, %v109
    %v112 = vld [vmem:[%s0] sm:$0xff]
    %114 = vset.pattern.permute.xlu0 0
    %115 = vperm.xlu0 %114, %v112
    %v116 = vpop.permute.xlu0 %115
    %v119 = vlaneseq
    %v120 = vshrl.u32 %v119, 7
    %v121 = vsub.s32 0, %v120
    %v122 = vrot.slane %v55, %v121
    %v123 = vlaneseq
    %v124 = vshrl.u32 %v123, 7
    %v125 = vsub.s32 1, %v124
    %v126 = vrot.slane %v55, %v125
    %v127 = vlaneseq
    %v128 = vshrl.u32 %v127, 7
    %v129 = vsub.s32 2, %v128
    %v130 = vrot.slane %v55, %v129
    %v134 = vmul.f32 %v116, %v122
    %v135 = vmul.f32 %v116, %v126
    %v136 = vmul.f32 %v116, %v130
    %v138 = vlaneseq
    %v139 = vshrl.u32 %v138, 7
    %v140 = vsub.s32 0, %v139
    %v141 = vrot.slane %v56, %v140
    %v142 = vlaneseq
    %v143 = vshrl.u32 %v142, 7
    %v144 = vsub.s32 1, %v143
    %v145 = vrot.slane %v56, %v144
    %v146 = vlaneseq
    %v147 = vshrl.u32 %v146, 7
    %v148 = vsub.s32 2, %v147
    %v149 = vrot.slane %v56, %v148
    %v153 = vadd.f32 %v134, %v141
    %v154 = vadd.f32 %v135, %v145
    %v155 = vadd.f32 %v136, %v149
    %156 = vmatprep.subr.mxu0 %v58
    %157 = vmatpush1.msra.mxu0 %v57
    %158 = vmatprep.subr.mxu0 %v61
    %159 = vmatpush1.msra.mxu0 %v60
    %160 = vmatprep.subr.mxu0 %v64
    %161 = vmatpush1.msra.mxu0 %v63
    %162 = vmatprep.subr.mxu0 %v67
    %163 = vmatpush1.msra.mxu0 %v66
    %164 = vmatprep.subr.mxu0 %v70
    %165 = vmatpush1.msra.mxu0 %v69
    %166 = vmatprep.subr.mxu0 %v73
    %167 = vmatpush1.msra.mxu0 %v72
    %168 = vmatprep.subr.mxu0 %v76
    %169 = vmatpush1.msra.mxu0 %v75
    %170 = vmatprep.subr.mxu0 %v79
    %171 = vmatpush1.msra.mxu0 %v78
    %172 = vmatprep.subr.mxu0 %v82
    %173 = vmatpush1.msra.mxu0 %v81
    %174 = vmatprep.subr.mxu0 %v85
    %175 = vmatpush1.msra.mxu0 %v84
    %176 = vmatprep.subr.mxu0 %v88
    %177 = vmatpush1.msra.mxu0 %v87
    %178 = vmatprep.subr.mxu0 %v91
    %179 = vmatpush1.msra.mxu0 %v90
    %180 = vmatprep.subr.mxu0 %v94
    %181 = vmatpush1.msra.mxu0 %v93
    %182 = vmatprep.subr.mxu0 %v97
    %183 = vmatpush1.msra.mxu0 %v96
    %184 = vmatprep.subr.mxu0 %v100
    %185 = vmatpush1.msra.mxu0 %v99
    %186 = vmatprep.subr.mxu0 %v103
    %187 = vmatpush1.msra.mxu0 %v102
    %188 = vmatprep.subr.mxu0 0.0
    %189 = vmatpush1.msra.mxu0 0.0
    %190 = vmatprep.subr.mxu0 0.0
    %191 = vmatpush1.msra.mxu0 0.0
    %192 = vmatprep.subr.mxu0 0.0
    %193 = vmatpush1.msra.mxu0 0.0
    %194 = vmatprep.subr.mxu0 0.0
    %195 = vmatpush1.msra.mxu0 0.0
    %196 = vmatprep.subr.mxu0 0.0
    %197 = vmatpush1.msra.mxu0 0.0
    %198 = vmatprep.subr.mxu0 0.0
    %199 = vmatpush1.msra.mxu0 0.0
    %200 = vmatprep.subr.mxu0 0.0
    %201 = vmatpush1.msra.mxu0 0.0
    %202 = vmatprep.subr.mxu0 0.0
    %203 = vmatpush1.msra.mxu0 0.0
    %204 = vmatprep.subr.mxu0 0.0
    %205 = vmatpush1.msra.mxu0 0.0
    %206 = vmatprep.subr.mxu0 0.0
    %207 = vmatpush1.msra.mxu0 0.0
    %208 = vmatprep.subr.mxu0 0.0
    %209 = vmatpush1.msra.mxu0 0.0
    %210 = vmatprep.subr.mxu0 0.0
    %211 = vmatpush1.msra.mxu0 0.0
    %212 = vmatprep.subr.mxu0 0.0
    %213 = vmatpush1.msra.mxu0 0.0
    %214 = vmatprep.subr.mxu0 0.0
    %215 = vmatpush1.msra.mxu0 0.0
    %216 = vmatprep.subr.mxu0 0.0
    %217 = vmatpush1.msra.mxu0 0.0
    %218 = vmatprep.subr.mxu0 0.0
    %219 = vmatpush1.msra.mxu0 0.0
    %220 = vmatprep.mubr.f32.mxu0 0.0
    %221 = vmatmul.mubr.f32.gmra.mrb[0].mxu0 0.0
    %v222 = vpop.f32.mrb[0].mxu0
    %v223 = vadd.f32 0.0, %v222
    %v224 = vpop.f32.mrb[0].mxu0
    %v225 = vadd.f32 0.0, %v224
    %226 = vdwg.mxu0
    %227 = vmatprep.subr.mxu0 0.0
    %228 = vmatpush1.msra.mxu0 %v59
    %229 = vmatprep.subr.mxu0 0.0
    %230 = vmatpush1.msra.mxu0 %v62
    %231 = vmatprep.subr.mxu0 0.0
    %232 = vmatpush1.msra.mxu0 %v65
    %233 = vmatprep.subr.mxu0 0.0
    %234 = vmatpush1.msra.mxu0 %v68
    %235 = vmatprep.subr.mxu0 0.0
    %236 = vmatpush1.msra.mxu0 %v71
    %237 = vmatprep.subr.mxu0 0.0
    %238 = vmatpush1.msra.mxu0 %v74
    %239 = vmatprep.subr.mxu0 0.0
    %240 = vmatpush1.msra.mxu0 %v77
    %241 = vmatprep.subr.mxu0 0.0
    %242 = vmatpush1.msra.mxu0 %v80
    %243 = vmatprep.subr.mxu0 0.0
    %244 = vmatpush1.msra.mxu0 %v83
    %245 = vmatprep.subr.mxu0 0.0
    %246 = vmatpush1.msra.mxu0 %v86
    %247 = vmatprep.subr.mxu0 0.0
    %248 = vmatpush1.msra.mxu0 %v89
    %249 = vmatprep.subr.mxu0 0.0
    %250 = vmatpush1.msra.mxu0 %v92
    %251 = vmatprep.subr.mxu0 0.0
    %252 = vmatpush1.msra.mxu0 %v95
    %253 = vmatprep.subr.mxu0 0.0
    %254 = vmatpush1.msra.mxu0 %v98
    %255 = vmatprep.subr.mxu0 0.0
    %256 = vmatpush1.msra.mxu0 %v101
    %257 = vmatprep.subr.mxu0 0.0
    %258 = vmatpush1.msra.mxu0 %v104
    %259 = vmatprep.subr.mxu0 0.0
    %260 = vmatpush1.msra.mxu0 0.0
    %261 = vmatprep.subr.mxu0 0.0
    %262 = vmatpush1.msra.mxu0 0.0
    %263 = vmatprep.subr.mxu0 0.0
    %264 = vmatpush1.msra.mxu0 0.0
    %265 = vmatprep.subr.mxu0 0.0
    %266 = vmatpush1.msra.mxu0 0.0
    %267 = vmatprep.subr.mxu0 0.0
    %268 = vmatpush1.msra.mxu0 0.0
    %269 = vmatprep.subr.mxu0 0.0
    %270 = vmatpush1.msra.mxu0 0.0
    %271 = vmatprep.subr.mxu0 0.0
    %272 = vmatpush1.msra.mxu0 0.0
    %273 = vmatprep.subr.mxu0 0.0
    %274 = vmatpush1.msra.mxu0 0.0
    %275 = vmatprep.subr.mxu0 0.0
    %276 = vmatpush1.msra.mxu0 0.0
    %277 = vmatprep.subr.mxu0 0.0
    %278 = vmatpush1.msra.mxu0 0.0
    %279 = vmatprep.subr.mxu0 0.0
    %280 = vmatpush1.msra.mxu0 0.0
    %281 = vmatprep.subr.mxu0 0.0
    %282 = vmatpush1.msra.mxu0 0.0
    %283 = vmatprep.subr.mxu0 0.0
    %284 = vmatpush1.msra.mxu0 0.0
    %285 = vmatprep.subr.mxu0 0.0
    %286 = vmatpush1.msra.mxu0 0.0
    %287 = vmatprep.subr.mxu0 0.0
    %288 = vmatpush1.msra.mxu0 0.0
    %289 = vmatprep.subr.mxu0 0.0
    %290 = vmatpush1.msra.mxu0 0.0
    %291 = vmatprep.mubr.f32.mxu0 0.0
    %292 = vmatmul.mubr.f32.gmra.mrb[0].mxu0 0.0
    %v293 = vpop.f32.mrb[0].mxu0
    %v294 = vadd.f32 0.0, %v293
    %v295 = vpop.f32.mrb[0].mxu0
    %296 = vdwg.mxu0
    %v297 = vadd.f32 %v153, %v223
    %v298 = vxor.u32 %v297, 2147483648
    %v299 = vmul.f32 %v298, 1.442695
    %v300 = vpow.pop %v299
    %v301 = vadd.f32 %v300, 1.0
    %v302 = vrcp.pop %v301
    %v303 = vmul.f32 1.0, %v302
    %v304 = vadd.f32 %v154, %v225
    %v305 = vxor.u32 %v304, 2147483648
    %v306 = vmul.f32 %v305, 1.442695
    %v307 = vpow.pop %v306
    %v308 = vadd.f32 %v307, 1.0
    %v309 = vrcp.pop %v308
    %v310 = vmul.f32 1.0, %v309
    %v311 = vadd.f32 %v294, %v110
    %v312 = vmul.f32 %v303, %v311
    %v313 = vadd.f32 %v155, %v312
    %v314 = vtanh.pop %v313
    %v315 = vsub.f32 1.0, %v310
    %v316 = vmul.f32 %v315, %v314
    %v317 = vmul.f32 %v310, 0.0
    %v318 = vadd.f32 %v316, %v317
    %s319 = scalar_lea.vmem %s0, 8
    %v320 = vld [vmem:[%s319] sm:$0xff]
    %322 = vset.pattern.permute.xlu0 0
    %323 = vperm.xlu0 %322, %v320
    %v324 = vpop.permute.xlu0 %323
    %v326 = vmul.f32 %v324, %v122
    %v327 = vmul.f32 %v324, %v126
    %v328 = vmul.f32 %v324, %v130
    %v329 = vadd.f32 %v326, %v141
    %v330 = vadd.f32 %v327, %v145
    %v331 = vadd.f32 %v328, %v149
    %332 = vmatprep.subr.mxu0 %v58
    %333 = vmatpush1.msra.mxu0 %v57
    %334 = vmatprep.subr.mxu0 %v61
    %335 = vmatpush1.msra.mxu0 %v60
    %336 = vmatprep.subr.mxu0 %v64
    %337 = vmatpush1.msra.mxu0 %v63
    %338 = vmatprep.subr.mxu0 %v67
    %339 = vmatpush1.msra.mxu0 %v66
    %340 = vmatprep.subr.mxu0 %v70
    %341 = vmatpush1.msra.mxu0 %v69
    %342 = vmatprep.subr.mxu0 %v73
    %343 = vmatpush1.msra.mxu0 %v72
    %344 = vmatprep.subr.mxu0 %v76
    %345 = vmatpush1.msra.mxu0 %v75
    %346 = vmatprep.subr.mxu0 %v79
    %347 = vmatpush1.msra.mxu0 %v78
    %348 = vmatprep.subr.mxu0 %v82
    %349 = vmatpush1.msra.mxu0 %v81
    %350 = vmatprep.subr.mxu0 %v85
    %351 = vmatpush1.msra.mxu0 %v84
    %352 = vmatprep.subr.mxu0 %v88
    %353 = vmatpush1.msra.mxu0 %v87
    %354 = vmatprep.subr.mxu0 %v91
    %355 = vmatpush1.msra.mxu0 %v90
    %356 = vmatprep.subr.mxu0 %v94
    %357 = vmatpush1.msra.mxu0 %v93
    %358 = vmatprep.subr.mxu0 %v97
    %359 = vmatpush1.msra.mxu0 %v96
    %360 = vmatprep.subr.mxu0 %v100
    %361 = vmatpush1.msra.mxu0 %v99
    %362 = vmatprep.subr.mxu0 %v103
    %363 = vmatpush1.msra.mxu0 %v102
    %364 = vmatprep.subr.mxu0 0.0
    %365 = vmatpush1.msra.mxu0 0.0
    %366 = vmatprep.subr.mxu0 0.0
    %367 = vmatpush1.msra.mxu0 0.0
    %368 = vmatprep.subr.mxu0 0.0
    %369 = vmatpush1.msra.mxu0 0.0
    %370 = vmatprep.subr.mxu0 0.0
    %371 = vmatpush1.msra.mxu0 0.0
    %372 = vmatprep.subr.mxu0 0.0
    %373 = vmatpush1.msra.mxu0 0.0
    %374 = vmatprep.subr.mxu0 0.0
    %375 = vmatpush1.msra.mxu0 0.0
    %376 = vmatprep.subr.mxu0 0.0
    %377 = vmatpush1.msra.mxu0 0.0
    %378 = vmatprep.subr.mxu0 0.0
    %379 = vmatpush1.msra.mxu0 0.0
    %380 = vmatprep.subr.mxu0 0.0
    %381 = vmatpush1.msra.mxu0 0.0
    %382 = vmatprep.subr.mxu0 0.0
    %383 = vmatpush1.msra.mxu0 0.0
    %384 = vmatprep.subr.mxu0 0.0
    %385 = vmatpush1.msra.mxu0 0.0
    %386 = vmatprep.subr.mxu0 0.0
    %387 = vmatpush1.msra.mxu0 0.0
    %388 = vmatprep.subr.mxu0 0.0
    %389 = vmatpush1.msra.mxu0 0.0
    %390 = vmatprep.subr.mxu0 0.0
    %391 = vmatpush1.msra.mxu0 0.0
    %392 = vmatprep.subr.mxu0 0.0
    %393 = vmatpush1.msra.mxu0 0.0
    %394 = vmatprep.subr.mxu0 0.0
    %395 = vmatpush1.msra.mxu0 0.0
    %396 = vmatprep.mubr.f32.mxu0 0.0
    %397 = vmatmul.mubr.f32.gmra.mrb[0].mxu0 %v318
    %v398 = vpop.f32.mrb[0].mxu0
    %v399 = vadd.f32 0.0, %v398
    %v400 = vpop.f32.mrb[0].mxu0
    %v401 = vadd.f32 0.0, %v400
    %402 = vdwg.mxu0
    %403 = vmatprep.subr.mxu0 0.0
    %404 = vmatpush1.msra.mxu0 %v59
    %405 = vmatprep.subr.mxu0 0.0
    %406 = vmatpush1.msra.mxu0 %v62
    %407 = vmatprep.subr.mxu0 0.0
    %408 = vmatpush1.msra.mxu0 %v65
    %409 = vmatprep.subr.mxu0 0.0
    %410 = vmatpush1.msra.mxu0 %v68
    %411 = vmatprep.subr.mxu0 0.0
    %412 = vmatpush1.msra.mxu0 %v71
    %413 = vmatprep.subr.mxu0 0.0
    %414 = vmatpush1.msra.mxu0 %v74
    %415 = vmatprep.subr.mxu0 0.0
    %416 = vmatpush1.msra.mxu0 %v77
    %417 = vmatprep.subr.mxu0 0.0
    %418 = vmatpush1.msra.mxu0 %v80
    %419 = vmatprep.subr.mxu0 0.0
    %420 = vmatpush1.msra.mxu0 %v83
    %421 = vmatprep.subr.mxu0 0.0
    %422 = vmatpush1.msra.mxu0 %v86
    %423 = vmatprep.subr.mxu0 0.0
    %424 = vmatpush1.msra.mxu0 %v89
    %425 = vmatprep.subr.mxu0 0.0
    %426 = vmatpush1.msra.mxu0 %v92
    %427 = vmatprep.subr.mxu0 0.0
    %428 = vmatpush1.msra.mxu0 %v95
    %429 = vmatprep.subr.mxu0 0.0
    %430 = vmatpush1.msra.mxu0 %v98
    %431 = vmatprep.subr.mxu0 0.0
    %432 = vmatpush1.msra.mxu0 %v101
    %433 = vmatprep.subr.mxu0 0.0
    %434 = vmatpush1.msra.mxu0 %v104
    %435 = vmatprep.subr.mxu0 0.0
    %436 = vmatpush1.msra.mxu0 0.0
    %437 = vmatprep.subr.mxu0 0.0
    %438 = vmatpush1.msra.mxu0 0.0
    %439 = vmatprep.subr.mxu0 0.0
    %440 = vmatpush1.msra.mxu0 0.0
    %441 = vmatprep.subr.mxu0 0.0
    %442 = vmatpush1.msra.mxu0 0.0
    %443 = vmatprep.subr.mxu0 0.0
    %444 = vmatpush1.msra.mxu0 0.0
    %445 = vmatprep.subr.mxu0 0.0
    %446 = vmatpush1.msra.mxu0 0.0
    %447 = vmatprep.subr.mxu0 0.0
    %448 = vmatpush1.msra.mxu0 0.0
    %449 = vmatprep.subr.mxu0 0.0
    %450 = vmatpush1.msra.mxu0 0.0
    %451 = vmatprep.subr.mxu0 0.0
    %452 = vmatpush1.msra.mxu0 0.0
    %453 = vmatprep.subr.mxu0 0.0
    %454 = vmatpush1.msra.mxu0 0.0
    %455 = vmatprep.subr.mxu0 0.0
    %456 = vmatpush1.msra.mxu0 0.0
    %457 = vmatprep.subr.mxu0 0.0
    %458 = vmatpush1.msra.mxu0 0.0
    %459 = vmatprep.subr.mxu0 0.0
    %460 = vmatpush1.msra.mxu0 0.0
    %461 = vmatprep.subr.mxu0 0.0
    %462 = vmatpush1.msra.mxu0 0.0
    %463 = vmatprep.subr.mxu0 0.0
    %464 = vmatpush1.msra.mxu0 0.0
    %465 = vmatprep.subr.mxu0 0.0
    %466 = vmatpush1.msra.mxu0 0.0
    %467 = vmatprep.mubr.f32.mxu0 0.0
    %468 = vmatmul.mubr.f32.gmra.mrb[0].mxu0 %v318
    %v469 = vpop.f32.mrb[0].mxu0
    %v470 = vadd.f32 0.0, %v469
    %v471 = vpop.f32.mrb[0].mxu0
    %472 = vdwg.mxu0
    %v473 = vadd.f32 %v329, %v399
    %v474 = vxor.u32 %v473, 2147483648
    %v475 = vmul.f32 %v474, 1.442695
    %v476 = vpow.pop %v475
    %v477 = vadd.f32 %v476, 1.0
    %v478 = vrcp.pop %v477
    %v479 = vmul.f32 1.0, %v478
    %v480 = vadd.f32 %v330, %v401
    %v481 = vxor.u32 %v480, 2147483648
    %v482 = vmul.f32 %v481, 1.442695
    %v483 = vpow.pop %v482
    %v484 = vadd.f32 %v483, 1.0
    %v485 = vrcp.pop %v484
    %v486 = vmul.f32 1.0, %v485
    %v487 = vadd.f32 %v470, %v110
    %v488 = vmul.f32 %v479, %v487
    %v489 = vadd.f32 %v331, %v488
    %v490 = vtanh.pop %v489
    %v491 = vsub.f32 1.0, %v486
    %v492 = vmul.f32 %v491, %v490
    %v493 = vmul.f32 %v486, %v318
    %v494 = vadd.f32 %v492, %v493
    %s495 = scalar_lea.vmem %s0, 16
    %v496 = vld [vmem:[%s495] sm:$0xff]
    %498 = vset.pattern.permute.xlu0 0
    %499 = vperm.xlu0 %498, %v496
    %v500 = vpop.permute.xlu0 %499
    %v502 = vmul.f32 %v500, %v122
    %v503 = vmul.f32 %v500, %v126
    %v504 = vmul.f32 %v500, %v130
    %v505 = vadd.f32 %v502, %v141
    %v506 = vadd.f32 %v503, %v145
    %v507 = vadd.f32 %v504, %v149
    %508 = vmatprep.subr.mxu0 %v58
    %509 = vmatpush1.msra.mxu0 %v57
    %510 = vmatprep.subr.mxu0 %v61
    %511 = vmatpush1.msra.mxu0 %v60
    %512 = vmatprep.subr.mxu0 %v64
    %513 = vmatpush1.msra.mxu0 %v63
    %514 = vmatprep.subr.mxu0 %v67
    %515 = vmatpush1.msra.mxu0 %v66
    %516 = vmatprep.subr.mxu0 %v70
    %517 = vmatpush1.msra.mxu0 %v69
    %518 = vmatprep.subr.mxu0 %v73
    %519 = vmatpush1.msra.mxu0 %v72
    %520 = vmatprep.subr.mxu0 %v76
    %521 = vmatpush1.msra.mxu0 %v75
    %522 = vmatprep.subr.mxu0 %v79
    %523 = vmatpush1.msra.mxu0 %v78
    %524 = vmatprep.subr.mxu0 %v82
    %525 = vmatpush1.msra.mxu0 %v81
    %526 = vmatprep.subr.mxu0 %v85
    %527 = vmatpush1.msra.mxu0 %v84
    %528 = vmatprep.subr.mxu0 %v88
    %529 = vmatpush1.msra.mxu0 %v87
    %530 = vmatprep.subr.mxu0 %v91
    %531 = vmatpush1.msra.mxu0 %v90
    %532 = vmatprep.subr.mxu0 %v94
    %533 = vmatpush1.msra.mxu0 %v93
    %534 = vmatprep.subr.mxu0 %v97
    %535 = vmatpush1.msra.mxu0 %v96
    %536 = vmatprep.subr.mxu0 %v100
    %537 = vmatpush1.msra.mxu0 %v99
    %538 = vmatprep.subr.mxu0 %v103
    %539 = vmatpush1.msra.mxu0 %v102
    %540 = vmatprep.subr.mxu0 0.0
    %541 = vmatpush1.msra.mxu0 0.0
    %542 = vmatprep.subr.mxu0 0.0
    %543 = vmatpush1.msra.mxu0 0.0
    %544 = vmatprep.subr.mxu0 0.0
    %545 = vmatpush1.msra.mxu0 0.0
    %546 = vmatprep.subr.mxu0 0.0
    %547 = vmatpush1.msra.mxu0 0.0
    %548 = vmatprep.subr.mxu0 0.0
    %549 = vmatpush1.msra.mxu0 0.0
    %550 = vmatprep.subr.mxu0 0.0
    %551 = vmatpush1.msra.mxu0 0.0
    %552 = vmatprep.subr.mxu0 0.0
    %553 = vmatpush1.msra.mxu0 0.0
    %554 = vmatprep.subr.mxu0 0.0
    %555 = vmatpush1.msra.mxu0 0.0
    %556 = vmatprep.subr.mxu0 0.0
    %557 = vmatpush1.msra.mxu0 0.0
    %558 = vmatprep.subr.mxu0 0.0
    %559 = vmatpush1.msra.mxu0 0.0
    %560 = vmatprep.subr.mxu0 0.0
    %561 = vmatpush1.msra.mxu0 0.0
    %562 = vmatprep.subr.mxu0 0.0
    %563 = vmatpush1.msra.mxu0 0.0
    %564 = vmatprep.subr.mxu0 0.0
    %565 = vmatpush1.msra.mxu0 0.0
    %566 = vmatprep.subr.mxu0 0.0
    %567 = vmatpush1.msra.mxu0 0.0
    %568 = vmatprep.subr.mxu0 0.0
    %569 = vmatpush1.msra.mxu0 0.0
    %570 = vmatprep.subr.mxu0 0.0
    %571 = vmatpush1.msra.mxu0 0.0
    %572 = vmatprep.mubr.f32.mxu0 0.0
    %573 = vmatmul.mubr.f32.gmra.mrb[0].mxu0 %v494
    %v574 = vpop.f32.mrb[0].mxu0
    %v575 = vadd.f32 0.0, %v574
    %v576 = vpop.f32.mrb[0].mxu0
    %v577 = vadd.f32 0.0, %v576
    %578 = vdwg.mxu0
    %579 = vmatprep.subr.mxu0 0.0
    %580 = vmatpush1.msra.mxu0 %v59
    %581 = vmatprep.subr.mxu0 0.0
    %582 = vmatpush1.msra.mxu0 %v62
    %583 = vmatprep.subr.mxu0 0.0
    %584 = vmatpush1.msra.mxu0 %v65
    %585 = vmatprep.subr.mxu0 0.0
    %586 = vmatpush1.msra.mxu0 %v68
    %587 = vmatprep.subr.mxu0 0.0
    %588 = vmatpush1.msra.mxu0 %v71
    %589 = vmatprep.subr.mxu0 0.0
    %590 = vmatpush1.msra.mxu0 %v74
    %591 = vmatprep.subr.mxu0 0.0
    %592 = vmatpush1.msra.mxu0 %v77
    %593 = vmatprep.subr.mxu0 0.0
    %594 = vmatpush1.msra.mxu0 %v80
    %595 = vmatprep.subr.mxu0 0.0
    %596 = vmatpush1.msra.mxu0 %v83
    %597 = vmatprep.subr.mxu0 0.0
    %598 = vmatpush1.msra.mxu0 %v86
    %599 = vmatprep.subr.mxu0 0.0
    %600 = vmatpush1.msra.mxu0 %v89
    %601 = vmatprep.subr.mxu0 0.0
    %602 = vmatpush1.msra.mxu0 %v92
    %603 = vmatprep.subr.mxu0 0.0
    %604 = vmatpush1.msra.mxu0 %v95
    %605 = vmatprep.subr.mxu0 0.0
    %606 = vmatpush1.msra.mxu0 %v98
    %607 = vmatprep.subr.mxu0 0.0
    %608 = vmatpush1.msra.mxu0 %v101
    %609 = vmatprep.subr.mxu0 0.0
    %610 = vmatpush1.msra.mxu0 %v104
    %611 = vmatprep.subr.mxu0 0.0
    %612 = vmatpush1.msra.mxu0 0.0
    %613 = vmatprep.subr.mxu0 0.0
    %614 = vmatpush1.msra.mxu0 0.0
    %615 = vmatprep.subr.mxu0 0.0
    %616 = vmatpush1.msra.mxu0 0.0
    %617 = vmatprep.subr.mxu0 0.0
    %618 = vmatpush1.msra.mxu0 0.0
    %619 = vmatprep.subr.mxu0 0.0
    %620 = vmatpush1.msra.mxu0 0.0
    %621 = vmatprep.subr.mxu0 0.0
    %622 = vmatpush1.msra.mxu0 0.0
    %623 = vmatprep.subr.mxu0 0.0
    %624 = vmatpush1.msra.mxu0 0.0
    %625 = vmatprep.subr.mxu0 0.0
    %626 = vmatpush1.msra.mxu0 0.0
    %627 = vmatprep.subr.mxu0 0.0
    %628 = vmatpush1.msra.mxu0 0.0
    %629 = vmatprep.subr.mxu0 0.0
    %630 = vmatpush1.msra.mxu0 0.0
    %631 = vmatprep.subr.mxu0 0.0
    %632 = vmatpush1.msra.mxu0 0.0
    %633 = vmatprep.subr.mxu0 0.0
    %634 = vmatpush1.msra.mxu0 0.0
    %635 = vmatprep.subr.mxu0 0.0
    %636 = vmatpush1.msra.mxu0 0.0
    %637 = vmatprep.subr.mxu0 0.0
    %638 = vmatpush1.msra.mxu0 0.0
    %639 = vmatprep.subr.mxu0 0.0
    %640 = vmatpush1.msra.mxu0 0.0
    %641 = vmatprep.subr.mxu0 0.0
    %642 = vmatpush1.msra.mxu0 0.0
    %643 = vmatprep.mubr.f32.mxu0 0.0
    %644 = vmatmul.mubr.f32.gmra.mrb[0].mxu0 %v494
    %v645 = vpop.f32.mrb[0].mxu0
    %v646 = vadd.f32 0.0, %v645
    %v647 = vpop.f32.mrb[0].mxu0
    %648 = vdwg.mxu0
    %v649 = vadd.f32 %v505, %v575
    %v650 = vxor.u32 %v649, 2147483648
    %v651 = vmul.f32 %v650, 1.442695
    %v652 = vpow.pop %v651
    %v653 = vadd.f32 %v652, 1.0
    %v654 = vrcp.pop %v653
    %v655 = vmul.f32 1.0, %v654
    %v656 = vadd.f32 %v506, %v577
    %v657 = vxor.u32 %v656, 2147483648
    %v658 = vmul.f32 %v657, 1.442695
    %v659 = vpow.pop %v658
    %v660 = vadd.f32 %v659, 1.0
    %v661 = vrcp.pop %v660
    %v662 = vmul.f32 1.0, %v661
    %v663 = vadd.f32 %v646, %v110
    %v664 = vmul.f32 %v655, %v663
    %v665 = vadd.f32 %v507, %v664
    %v666 = vtanh.pop %v665
    %v667 = vsub.f32 1.0, %v662
    %v668 = vmul.f32 %v667, %v666
    %v669 = vmul.f32 %v662, %v494
    %v670 = vadd.f32 %v668, %v669
    %s671 = scalar_lea.vmem %s0, 24
    %v672 = vld [vmem:[%s671] sm:$0xff]
    %674 = vset.pattern.permute.xlu0 0
    %675 = vperm.xlu0 %674, %v672
    %v676 = vpop.permute.xlu0 %675
    %v678 = vmul.f32 %v676, %v122
    %v679 = vmul.f32 %v676, %v126
    %v680 = vmul.f32 %v676, %v130
    %v681 = vadd.f32 %v678, %v141
    %v682 = vadd.f32 %v679, %v145
    %v683 = vadd.f32 %v680, %v149
    %684 = vmatprep.subr.mxu0 %v58
    %685 = vmatpush1.msra.mxu0 %v57
    %686 = vmatprep.subr.mxu0 %v61
    %687 = vmatpush1.msra.mxu0 %v60
    %688 = vmatprep.subr.mxu0 %v64
    %689 = vmatpush1.msra.mxu0 %v63
    %690 = vmatprep.subr.mxu0 %v67
    %691 = vmatpush1.msra.mxu0 %v66
    %692 = vmatprep.subr.mxu0 %v70
    %693 = vmatpush1.msra.mxu0 %v69
    %694 = vmatprep.subr.mxu0 %v73
    %695 = vmatpush1.msra.mxu0 %v72
    %696 = vmatprep.subr.mxu0 %v76
    %697 = vmatpush1.msra.mxu0 %v75
    %698 = vmatprep.subr.mxu0 %v79
    %699 = vmatpush1.msra.mxu0 %v78
    %700 = vmatprep.subr.mxu0 %v82
    %701 = vmatpush1.msra.mxu0 %v81
    %702 = vmatprep.subr.mxu0 %v85
    %703 = vmatpush1.msra.mxu0 %v84
    %704 = vmatprep.subr.mxu0 %v88
    %705 = vmatpush1.msra.mxu0 %v87
    %706 = vmatprep.subr.mxu0 %v91
    %707 = vmatpush1.msra.mxu0 %v90
    %708 = vmatprep.subr.mxu0 %v94
    %709 = vmatpush1.msra.mxu0 %v93
    %710 = vmatprep.subr.mxu0 %v97
    %711 = vmatpush1.msra.mxu0 %v96
    %712 = vmatprep.subr.mxu0 %v100
    %713 = vmatpush1.msra.mxu0 %v99
    %714 = vmatprep.subr.mxu0 %v103
    %715 = vmatpush1.msra.mxu0 %v102
    %716 = vmatprep.subr.mxu0 0.0
    %717 = vmatpush1.msra.mxu0 0.0
    %718 = vmatprep.subr.mxu0 0.0
    %719 = vmatpush1.msra.mxu0 0.0
    %720 = vmatprep.subr.mxu0 0.0
    %721 = vmatpush1.msra.mxu0 0.0
    %722 = vmatprep.subr.mxu0 0.0
    %723 = vmatpush1.msra.mxu0 0.0
    %724 = vmatprep.subr.mxu0 0.0
    %725 = vmatpush1.msra.mxu0 0.0
    %726 = vmatprep.subr.mxu0 0.0
    %727 = vmatpush1.msra.mxu0 0.0
    %728 = vmatprep.subr.mxu0 0.0
    %729 = vmatpush1.msra.mxu0 0.0
    %730 = vmatprep.subr.mxu0 0.0
    %731 = vmatpush1.msra.mxu0 0.0
    %732 = vmatprep.subr.mxu0 0.0
    %733 = vmatpush1.msra.mxu0 0.0
    %734 = vmatprep.subr.mxu0 0.0
    %735 = vmatpush1.msra.mxu0 0.0
    %736 = vmatprep.subr.mxu0 0.0
    %737 = vmatpush1.msra.mxu0 0.0
    %738 = vmatprep.subr.mxu0 0.0
    %739 = vmatpush1.msra.mxu0 0.0
    %740 = vmatprep.subr.mxu0 0.0
    %741 = vmatpush1.msra.mxu0 0.0
    %742 = vmatprep.subr.mxu0 0.0
    %743 = vmatpush1.msra.mxu0 0.0
    %744 = vmatprep.subr.mxu0 0.0
    %745 = vmatpush1.msra.mxu0 0.0
    %746 = vmatprep.subr.mxu0 0.0
    %747 = vmatpush1.msra.mxu0 0.0
    %748 = vmatprep.mubr.f32.mxu0 0.0
    %749 = vmatmul.mubr.f32.gmra.mrb[0].mxu0 %v670
    %v750 = vpop.f32.mrb[0].mxu0
    %v751 = vadd.f32 0.0, %v750
    %v752 = vpop.f32.mrb[0].mxu0
    %v753 = vadd.f32 0.0, %v752
    %754 = vdwg.mxu0
    %755 = vmatprep.subr.mxu0 0.0
    %756 = vmatpush1.msra.mxu0 %v59
    %757 = vmatprep.subr.mxu0 0.0
    %758 = vmatpush1.msra.mxu0 %v62
    %759 = vmatprep.subr.mxu0 0.0
    %760 = vmatpush1.msra.mxu0 %v65
    %761 = vmatprep.subr.mxu0 0.0
    %762 = vmatpush1.msra.mxu0 %v68
    %763 = vmatprep.subr.mxu0 0.0
    %764 = vmatpush1.msra.mxu0 %v71
    %765 = vmatprep.subr.mxu0 0.0
    %766 = vmatpush1.msra.mxu0 %v74
    %767 = vmatprep.subr.mxu0 0.0
    %768 = vmatpush1.msra.mxu0 %v77
    %769 = vmatprep.subr.mxu0 0.0
    %770 = vmatpush1.msra.mxu0 %v80
    %771 = vmatprep.subr.mxu0 0.0
    %772 = vmatpush1.msra.mxu0 %v83
    %773 = vmatprep.subr.mxu0 0.0
    %774 = vmatpush1.msra.mxu0 %v86
    %775 = vmatprep.subr.mxu0 0.0
    %776 = vmatpush1.msra.mxu0 %v89
    %777 = vmatprep.subr.mxu0 0.0
    %778 = vmatpush1.msra.mxu0 %v92
    %779 = vmatprep.subr.mxu0 0.0
    %780 = vmatpush1.msra.mxu0 %v95
    %781 = vmatprep.subr.mxu0 0.0
    %782 = vmatpush1.msra.mxu0 %v98
    %783 = vmatprep.subr.mxu0 0.0
    %784 = vmatpush1.msra.mxu0 %v101
    %785 = vmatprep.subr.mxu0 0.0
    %786 = vmatpush1.msra.mxu0 %v104
    %787 = vmatprep.subr.mxu0 0.0
    %788 = vmatpush1.msra.mxu0 0.0
    %789 = vmatprep.subr.mxu0 0.0
    %790 = vmatpush1.msra.mxu0 0.0
    %791 = vmatprep.subr.mxu0 0.0
    %792 = vmatpush1.msra.mxu0 0.0
    %793 = vmatprep.subr.mxu0 0.0
    %794 = vmatpush1.msra.mxu0 0.0
    %795 = vmatprep.subr.mxu0 0.0
    %796 = vmatpush1.msra.mxu0 0.0
    %797 = vmatprep.subr.mxu0 0.0
    %798 = vmatpush1.msra.mxu0 0.0
    %799 = vmatprep.subr.mxu0 0.0
    %800 = vmatpush1.msra.mxu0 0.0
    %801 = vmatprep.subr.mxu0 0.0
    %802 = vmatpush1.msra.mxu0 0.0
    %803 = vmatprep.subr.mxu0 0.0
    %804 = vmatpush1.msra.mxu0 0.0
    %805 = vmatprep.subr.mxu0 0.0
    %806 = vmatpush1.msra.mxu0 0.0
    %807 = vmatprep.subr.mxu0 0.0
    %808 = vmatpush1.msra.mxu0 0.0
    %809 = vmatprep.subr.mxu0 0.0
    %810 = vmatpush1.msra.mxu0 0.0
    %811 = vmatprep.subr.mxu0 0.0
    %812 = vmatpush1.msra.mxu0 0.0
    %813 = vmatprep.subr.mxu0 0.0
    %814 = vmatpush1.msra.mxu0 0.0
    %815 = vmatprep.subr.mxu0 0.0
    %816 = vmatpush1.msra.mxu0 0.0
    %817 = vmatprep.subr.mxu0 0.0
    %818 = vmatpush1.msra.mxu0 0.0
    %819 = vmatprep.mubr.f32.mxu0 0.0
    %820 = vmatmul.mubr.f32.gmra.mrb[0].mxu0 %v670
    %v821 = vpop.f32.mrb[0].mxu0
    %v822 = vadd.f32 0.0, %v821
    %v823 = vpop.f32.mrb[0].mxu0
    %824 = vdwg.mxu0
    %v825 = vadd.f32 %v681, %v751
    %v826 = vxor.u32 %v825, 2147483648
    %v827 = vmul.f32 %v826, 1.442695
    %v828 = vpow.pop %v827
    %v829 = vadd.f32 %v828, 1.0
    %v830 = vrcp.pop %v829
    %v831 = vmul.f32 1.0, %v830
    %v832 = vadd.f32 %v682, %v753
    %v833 = vxor.u32 %v832, 2147483648
    %v834 = vmul.f32 %v833, 1.442695
    %v835 = vpow.pop %v834
    %v836 = vadd.f32 %v835, 1.0
    %v837 = vrcp.pop %v836
    %v838 = vmul.f32 1.0, %v837
    %v839 = vadd.f32 %v822, %v110
    %v840 = vmul.f32 %v831, %v839
    %v841 = vadd.f32 %v683, %v840
    %v842 = vtanh.pop %v841
    %v843 = vsub.f32 1.0, %v838
    %v844 = vmul.f32 %v843, %v842
    %v845 = vmul.f32 %v838, %v670
    %v846 = vadd.f32 %v844, %v845
    %s847 = scalar_lea.vmem %s0, 32
    %v848 = vld [vmem:[%s847] sm:$0xff]
    %850 = vset.pattern.permute.xlu0 0
    %851 = vperm.xlu0 %850, %v848
    %v852 = vpop.permute.xlu0 %851
    %v854 = vmul.f32 %v852, %v122
    %v855 = vmul.f32 %v852, %v126
    %v856 = vmul.f32 %v852, %v130
    %v857 = vadd.f32 %v854, %v141
    %v858 = vadd.f32 %v855, %v145
    %v859 = vadd.f32 %v856, %v149
    %860 = vmatprep.subr.mxu0 %v58
    %861 = vmatpush1.msra.mxu0 %v57
    %862 = vmatprep.subr.mxu0 %v61
    %863 = vmatpush1.msra.mxu0 %v60
    %864 = vmatprep.subr.mxu0 %v64
    %865 = vmatpush1.msra.mxu0 %v63
    %866 = vmatprep.subr.mxu0 %v67
    %867 = vmatpush1.msra.mxu0 %v66
    %868 = vmatprep.subr.mxu0 %v70
    %869 = vmatpush1.msra.mxu0 %v69
    %870 = vmatprep.subr.mxu0 %v73
    %871 = vmatpush1.msra.mxu0 %v72
    %872 = vmatprep.subr.mxu0 %v76
    %873 = vmatpush1.msra.mxu0 %v75
    %874 = vmatprep.subr.mxu0 %v79
    %875 = vmatpush1.msra.mxu0 %v78
    %876 = vmatprep.subr.mxu0 %v82
    %877 = vmatpush1.msra.mxu0 %v81
    %878 = vmatprep.subr.mxu0 %v85
    %879 = vmatpush1.msra.mxu0 %v84
    %880 = vmatprep.subr.mxu0 %v88
    %881 = vmatpush1.msra.mxu0 %v87
    %882 = vmatprep.subr.mxu0 %v91
    %883 = vmatpush1.msra.mxu0 %v90
    %884 = vmatprep.subr.mxu0 %v94
    %885 = vmatpush1.msra.mxu0 %v93
    %886 = vmatprep.subr.mxu0 %v97
    %887 = vmatpush1.msra.mxu0 %v96
    %888 = vmatprep.subr.mxu0 %v100
    %889 = vmatpush1.msra.mxu0 %v99
    %890 = vmatprep.subr.mxu0 %v103
    %891 = vmatpush1.msra.mxu0 %v102
    %892 = vmatprep.subr.mxu0 0.0
    %893 = vmatpush1.msra.mxu0 0.0
    %894 = vmatprep.subr.mxu0 0.0
    %895 = vmatpush1.msra.mxu0 0.0
    %896 = vmatprep.subr.mxu0 0.0
    %897 = vmatpush1.msra.mxu0 0.0
    %898 = vmatprep.subr.mxu0 0.0
    %899 = vmatpush1.msra.mxu0 0.0
    %900 = vmatprep.subr.mxu0 0.0
    %901 = vmatpush1.msra.mxu0 0.0
    %902 = vmatprep.subr.mxu0 0.0
    %903 = vmatpush1.msra.mxu0 0.0
    %904 = vmatprep.subr.mxu0 0.0
    %905 = vmatpush1.msra.mxu0 0.0
    %906 = vmatprep.subr.mxu0 0.0
    %907 = vmatpush1.msra.mxu0 0.0
    %908 = vmatprep.subr.mxu0 0.0
    %909 = vmatpush1.msra.mxu0 0.0
    %910 = vmatprep.subr.mxu0 0.0
    %911 = vmatpush1.msra.mxu0 0.0
    %912 = vmatprep.subr.mxu0 0.0
    %913 = vmatpush1.msra.mxu0 0.0
    %914 = vmatprep.subr.mxu0 0.0
    %915 = vmatpush1.msra.mxu0 0.0
    %916 = vmatprep.subr.mxu0 0.0
    %917 = vmatpush1.msra.mxu0 0.0
    %918 = vmatprep.subr.mxu0 0.0
    %919 = vmatpush1.msra.mxu0 0.0
    %920 = vmatprep.subr.mxu0 0.0
    %921 = vmatpush1.msra.mxu0 0.0
    %922 = vmatprep.subr.mxu0 0.0
    %923 = vmatpush1.msra.mxu0 0.0
    %924 = vmatprep.mubr.f32.mxu0 0.0
    %925 = vmatmul.mubr.f32.gmra.mrb[0].mxu0 %v846
    %v926 = vpop.f32.mrb[0].mxu0
    %v927 = vadd.f32 0.0, %v926
    %v928 = vpop.f32.mrb[0].mxu0
    %v929 = vadd.f32 0.0, %v928
    %930 = vdwg.mxu0
    %931 = vmatprep.subr.mxu0 0.0
    %932 = vmatpush1.msra.mxu0 %v59
    %933 = vmatprep.subr.mxu0 0.0
    %934 = vmatpush1.msra.mxu0 %v62
    %935 = vmatprep.subr.mxu0 0.0
    %936 = vmatpush1.msra.mxu0 %v65
    %937 = vmatprep.subr.mxu0 0.0
    %938 = vmatpush1.msra.mxu0 %v68
    %939 = vmatprep.subr.mxu0 0.0
    %940 = vmatpush1.msra.mxu0 %v71
    %941 = vmatprep.subr.mxu0 0.0
    %942 = vmatpush1.msra.mxu0 %v74
    %943 = vmatprep.subr.mxu0 0.0
    %944 = vmatpush1.msra.mxu0 %v77
    %945 = vmatprep.subr.mxu0 0.0
    %946 = vmatpush1.msra.mxu0 %v80
    %947 = vmatprep.subr.mxu0 0.0
    %948 = vmatpush1.msra.mxu0 %v83
    %949 = vmatprep.subr.mxu0 0.0
    %950 = vmatpush1.msra.mxu0 %v86
    %951 = vmatprep.subr.mxu0 0.0
    %952 = vmatpush1.msra.mxu0 %v89
    %953 = vmatprep.subr.mxu0 0.0
    %954 = vmatpush1.msra.mxu0 %v92
    %955 = vmatprep.subr.mxu0 0.0
    %956 = vmatpush1.msra.mxu0 %v95
    %957 = vmatprep.subr.mxu0 0.0
    %958 = vmatpush1.msra.mxu0 %v98
    %959 = vmatprep.subr.mxu0 0.0
    %960 = vmatpush1.msra.mxu0 %v101
    %961 = vmatprep.subr.mxu0 0.0
    %962 = vmatpush1.msra.mxu0 %v104
    %963 = vmatprep.subr.mxu0 0.0
    %964 = vmatpush1.msra.mxu0 0.0
    %965 = vmatprep.subr.mxu0 0.0
    %966 = vmatpush1.msra.mxu0 0.0
    %967 = vmatprep.subr.mxu0 0.0
    %968 = vmatpush1.msra.mxu0 0.0
    %969 = vmatprep.subr.mxu0 0.0
    %970 = vmatpush1.msra.mxu0 0.0
    %971 = vmatprep.subr.mxu0 0.0
    %972 = vmatpush1.msra.mxu0 0.0
    %973 = vmatprep.subr.mxu0 0.0
    %974 = vmatpush1.msra.mxu0 0.0
    %975 = vmatprep.subr.mxu0 0.0
    %976 = vmatpush1.msra.mxu0 0.0
    %977 = vmatprep.subr.mxu0 0.0
    %978 = vmatpush1.msra.mxu0 0.0
    %979 = vmatprep.subr.mxu0 0.0
    %980 = vmatpush1.msra.mxu0 0.0
    %981 = vmatprep.subr.mxu0 0.0
    %982 = vmatpush1.msra.mxu0 0.0
    %983 = vmatprep.subr.mxu0 0.0
    %984 = vmatpush1.msra.mxu0 0.0
    %985 = vmatprep.subr.mxu0 0.0
    %986 = vmatpush1.msra.mxu0 0.0
    %987 = vmatprep.subr.mxu0 0.0
    %988 = vmatpush1.msra.mxu0 0.0
    %989 = vmatprep.subr.mxu0 0.0
    %990 = vmatpush1.msra.mxu0 0.0
    %991 = vmatprep.subr.mxu0 0.0
    %992 = vmatpush1.msra.mxu0 0.0
    %993 = vmatprep.subr.mxu0 0.0
    %994 = vmatpush1.msra.mxu0 0.0
    %995 = vmatprep.mubr.f32.mxu0 0.0
    %996 = vmatmul.mubr.f32.gmra.mrb[0].mxu0 %v846
    %v997 = vpop.f32.mrb[0].mxu0
    %v998 = vadd.f32 0.0, %v997
    %v999 = vpop.f32.mrb[0].mxu0
    %1000 = vdwg.mxu0
    %v1001 = vadd.f32 %v857, %v927
    %v1002 = vxor.u32 %v1001, 2147483648
    %v1003 = vmul.f32 %v1002, 1.442695
    %v1004 = vpow.pop %v1003
    %v1005 = vadd.f32 %v1004, 1.0
    %v1006 = vrcp.pop %v1005
    %v1007 = vmul.f32 1.0, %v1006
    %v1008 = vadd.f32 %v858, %v929
    %v1009 = vxor.u32 %v1008, 2147483648
    %v1010 = vmul.f32 %v1009, 1.442695
    %v1011 = vpow.pop %v1010
    %v1012 = vadd.f32 %v1011, 1.0
    %v1013 = vrcp.pop %v1012
    %v1014 = vmul.f32 1.0, %v1013
    %v1015 = vadd.f32 %v998, %v110
    %v1016 = vmul.f32 %v1007, %v1015
    %v1017 = vadd.f32 %v859, %v1016
    %v1018 = vtanh.pop %v1017
    %v1019 = vsub.f32 1.0, %v1014
    %v1020 = vmul.f32 %v1019, %v1018
    %v1021 = vmul.f32 %v1014, %v846
    %v1022 = vadd.f32 %v1020, %v1021
    %s1023 = scalar_lea.vmem %s0, 40
    %v1024 = vld [vmem:[%s1023] sm:$0xff]
    %1026 = vset.pattern.permute.xlu0 0
    %1027 = vperm.xlu0 %1026, %v1024
    %v1028 = vpop.permute.xlu0 %1027
    %v1030 = vmul.f32 %v1028, %v122
    %v1031 = vmul.f32 %v1028, %v126
    %v1032 = vmul.f32 %v1028, %v130
    %v1033 = vadd.f32 %v1030, %v141
    %v1034 = vadd.f32 %v1031, %v145
    %v1035 = vadd.f32 %v1032, %v149
    %1036 = vmatprep.subr.mxu0 %v58
    %1037 = vmatpush1.msra.mxu0 %v57
    %1038 = vmatprep.subr.mxu0 %v61
    %1039 = vmatpush1.msra.mxu0 %v60
    %1040 = vmatprep.subr.mxu0 %v64
    %1041 = vmatpush1.msra.mxu0 %v63
    %1042 = vmatprep.subr.mxu0 %v67
    %1043 = vmatpush1.msra.mxu0 %v66
    %1044 = vmatprep.subr.mxu0 %v70
    %1045 = vmatpush1.msra.mxu0 %v69
    %1046 = vmatprep.subr.mxu0 %v73
    %1047 = vmatpush1.msra.mxu0 %v72
    %1048 = vmatprep.subr.mxu0 %v76
    %1049 = vmatpush1.msra.mxu0 %v75
    %1050 = vmatprep.subr.mxu0 %v79
    %1051 = vmatpush1.msra.mxu0 %v78
    %1052 = vmatprep.subr.mxu0 %v82
    %1053 = vmatpush1.msra.mxu0 %v81
    %1054 = vmatprep.subr.mxu0 %v85
    %1055 = vmatpush1.msra.mxu0 %v84
    %1056 = vmatprep.subr.mxu0 %v88
    %1057 = vmatpush1.msra.mxu0 %v87
    %1058 = vmatprep.subr.mxu0 %v91
    %1059 = vmatpush1.msra.mxu0 %v90
    %1060 = vmatprep.subr.mxu0 %v94
    %1061 = vmatpush1.msra.mxu0 %v93
    %1062 = vmatprep.subr.mxu0 %v97
    %1063 = vmatpush1.msra.mxu0 %v96
    %1064 = vmatprep.subr.mxu0 %v100
    %1065 = vmatpush1.msra.mxu0 %v99
    %1066 = vmatprep.subr.mxu0 %v103
    %1067 = vmatpush1.msra.mxu0 %v102
    %1068 = vmatprep.subr.mxu0 0.0
    %1069 = vmatpush1.msra.mxu0 0.0
    %1070 = vmatprep.subr.mxu0 0.0
    %1071 = vmatpush1.msra.mxu0 0.0
    %1072 = vmatprep.subr.mxu0 0.0
    %1073 = vmatpush1.msra.mxu0 0.0
    %1074 = vmatprep.subr.mxu0 0.0
    %1075 = vmatpush1.msra.mxu0 0.0
    %1076 = vmatprep.subr.mxu0 0.0
    %1077 = vmatpush1.msra.mxu0 0.0
    %1078 = vmatprep.subr.mxu0 0.0
    %1079 = vmatpush1.msra.mxu0 0.0
    %1080 = vmatprep.subr.mxu0 0.0
    %1081 = vmatpush1.msra.mxu0 0.0
    %1082 = vmatprep.subr.mxu0 0.0
    %1083 = vmatpush1.msra.mxu0 0.0
    %1084 = vmatprep.subr.mxu0 0.0
    %1085 = vmatpush1.msra.mxu0 0.0
    %1086 = vmatprep.subr.mxu0 0.0
    %1087 = vmatpush1.msra.mxu0 0.0
    %1088 = vmatprep.subr.mxu0 0.0
    %1089 = vmatpush1.msra.mxu0 0.0
    %1090 = vmatprep.subr.mxu0 0.0
    %1091 = vmatpush1.msra.mxu0 0.0
    %1092 = vmatprep.subr.mxu0 0.0
    %1093 = vmatpush1.msra.mxu0 0.0
    %1094 = vmatprep.subr.mxu0 0.0
    %1095 = vmatpush1.msra.mxu0 0.0
    %1096 = vmatprep.subr.mxu0 0.0
    %1097 = vmatpush1.msra.mxu0 0.0
    %1098 = vmatprep.subr.mxu0 0.0
    %1099 = vmatpush1.msra.mxu0 0.0
    %1100 = vmatprep.mubr.f32.mxu0 0.0
    %1101 = vmatmul.mubr.f32.gmra.mrb[0].mxu0 %v1022
    %v1102 = vpop.f32.mrb[0].mxu0
    %v1103 = vadd.f32 0.0, %v1102
    %v1104 = vpop.f32.mrb[0].mxu0
    %v1105 = vadd.f32 0.0, %v1104
    %1106 = vdwg.mxu0
    %1107 = vmatprep.subr.mxu0 0.0
    %1108 = vmatpush1.msra.mxu0 %v59
    %1109 = vmatprep.subr.mxu0 0.0
    %1110 = vmatpush1.msra.mxu0 %v62
    %1111 = vmatprep.subr.mxu0 0.0
    %1112 = vmatpush1.msra.mxu0 %v65
    %1113 = vmatprep.subr.mxu0 0.0
    %1114 = vmatpush1.msra.mxu0 %v68
    %1115 = vmatprep.subr.mxu0 0.0
    %1116 = vmatpush1.msra.mxu0 %v71
    %1117 = vmatprep.subr.mxu0 0.0
    %1118 = vmatpush1.msra.mxu0 %v74
    %1119 = vmatprep.subr.mxu0 0.0
    %1120 = vmatpush1.msra.mxu0 %v77
    %1121 = vmatprep.subr.mxu0 0.0
    %1122 = vmatpush1.msra.mxu0 %v80
    %1123 = vmatprep.subr.mxu0 0.0
    %1124 = vmatpush1.msra.mxu0 %v83
    %1125 = vmatprep.subr.mxu0 0.0
    %1126 = vmatpush1.msra.mxu0 %v86
    %1127 = vmatprep.subr.mxu0 0.0
    %1128 = vmatpush1.msra.mxu0 %v89
    %1129 = vmatprep.subr.mxu0 0.0
    %1130 = vmatpush1.msra.mxu0 %v92
    %1131 = vmatprep.subr.mxu0 0.0
    %1132 = vmatpush1.msra.mxu0 %v95
    %1133 = vmatprep.subr.mxu0 0.0
    %1134 = vmatpush1.msra.mxu0 %v98
    %1135 = vmatprep.subr.mxu0 0.0
    %1136 = vmatpush1.msra.mxu0 %v101
    %1137 = vmatprep.subr.mxu0 0.0
    %1138 = vmatpush1.msra.mxu0 %v104
    %1139 = vmatprep.subr.mxu0 0.0
    %1140 = vmatpush1.msra.mxu0 0.0
    %1141 = vmatprep.subr.mxu0 0.0
    %1142 = vmatpush1.msra.mxu0 0.0
    %1143 = vmatprep.subr.mxu0 0.0
    %1144 = vmatpush1.msra.mxu0 0.0
    %1145 = vmatprep.subr.mxu0 0.0
    %1146 = vmatpush1.msra.mxu0 0.0
    %1147 = vmatprep.subr.mxu0 0.0
    %1148 = vmatpush1.msra.mxu0 0.0
    %1149 = vmatprep.subr.mxu0 0.0
    %1150 = vmatpush1.msra.mxu0 0.0
    %1151 = vmatprep.subr.mxu0 0.0
    %1152 = vmatpush1.msra.mxu0 0.0
    %1153 = vmatprep.subr.mxu0 0.0
    %1154 = vmatpush1.msra.mxu0 0.0
    %1155 = vmatprep.subr.mxu0 0.0
    %1156 = vmatpush1.msra.mxu0 0.0
    %1157 = vmatprep.subr.mxu0 0.0
    %1158 = vmatpush1.msra.mxu0 0.0
    %1159 = vmatprep.subr.mxu0 0.0
    %1160 = vmatpush1.msra.mxu0 0.0
    %1161 = vmatprep.subr.mxu0 0.0
    %1162 = vmatpush1.msra.mxu0 0.0
    %1163 = vmatprep.subr.mxu0 0.0
    %1164 = vmatpush1.msra.mxu0 0.0
    %1165 = vmatprep.subr.mxu0 0.0
    %1166 = vmatpush1.msra.mxu0 0.0
    %1167 = vmatprep.subr.mxu0 0.0
    %1168 = vmatpush1.msra.mxu0 0.0
    %1169 = vmatprep.subr.mxu0 0.0
    %1170 = vmatpush1.msra.mxu0 0.0
    %1171 = vmatprep.mubr.f32.mxu0 0.0
    %1172 = vmatmul.mubr.f32.gmra.mrb[0].mxu0 %v1022
    %v1173 = vpop.f32.mrb[0].mxu0
    %v1174 = vadd.f32 0.0, %v1173
    %v1175 = vpop.f32.mrb[0].mxu0
    %1176 = vdwg.mxu0
    %v1177 = vadd.f32 %v1033, %v1103
    %v1178 = vxor.u32 %v1177, 2147483648
    %v1179 = vmul.f32 %v1178, 1.442695
    %v1180 = vpow.pop %v1179
    %v1181 = vadd.f32 %v1180, 1.0
    %v1182 = vrcp.pop %v1181
    %v1183 = vmul.f32 1.0, %v1182
    %v1184 = vadd.f32 %v1034, %v1105
    %v1185 = vxor.u32 %v1184, 2147483648
    %v1186 = vmul.f32 %v1185, 1.442695
    %v1187 = vpow.pop %v1186
    %v1188 = vadd.f32 %v1187, 1.0
    %v1189 = vrcp.pop %v1188
    %v1190 = vmul.f32 1.0, %v1189
    %v1191 = vadd.f32 %v1174, %v110
    %v1192 = vmul.f32 %v1183, %v1191
    %v1193 = vadd.f32 %v1035, %v1192
    %v1194 = vtanh.pop %v1193
    %v1195 = vsub.f32 1.0, %v1190
    %v1196 = vmul.f32 %v1195, %v1194
    %v1197 = vmul.f32 %v1190, %v1022
    %v1198 = vadd.f32 %v1196, %v1197
    %s1199 = scalar_lea.vmem %s0, 48
    %v1200 = vld [vmem:[%s1199] sm:$0xff]
    %1202 = vset.pattern.permute.xlu0 0
    %1203 = vperm.xlu0 %1202, %v1200
    %v1204 = vpop.permute.xlu0 %1203
    %v1206 = vmul.f32 %v1204, %v122
    %v1207 = vmul.f32 %v1204, %v126
    %v1208 = vmul.f32 %v1204, %v130
    %v1209 = vadd.f32 %v1206, %v141
    %v1210 = vadd.f32 %v1207, %v145
    %v1211 = vadd.f32 %v1208, %v149
    %1212 = vmatprep.subr.mxu0 %v58
    %1213 = vmatpush1.msra.mxu0 %v57
    %1214 = vmatprep.subr.mxu0 %v61
    %1215 = vmatpush1.msra.mxu0 %v60
    %1216 = vmatprep.subr.mxu0 %v64
    %1217 = vmatpush1.msra.mxu0 %v63
    %1218 = vmatprep.subr.mxu0 %v67
    %1219 = vmatpush1.msra.mxu0 %v66
    %1220 = vmatprep.subr.mxu0 %v70
    %1221 = vmatpush1.msra.mxu0 %v69
    %1222 = vmatprep.subr.mxu0 %v73
    %1223 = vmatpush1.msra.mxu0 %v72
    %1224 = vmatprep.subr.mxu0 %v76
    %1225 = vmatpush1.msra.mxu0 %v75
    %1226 = vmatprep.subr.mxu0 %v79
    %1227 = vmatpush1.msra.mxu0 %v78
    %1228 = vmatprep.subr.mxu0 %v82
    %1229 = vmatpush1.msra.mxu0 %v81
    %1230 = vmatprep.subr.mxu0 %v85
    %1231 = vmatpush1.msra.mxu0 %v84
    %1232 = vmatprep.subr.mxu0 %v88
    %1233 = vmatpush1.msra.mxu0 %v87
    %1234 = vmatprep.subr.mxu0 %v91
    %1235 = vmatpush1.msra.mxu0 %v90
    %1236 = vmatprep.subr.mxu0 %v94
    %1237 = vmatpush1.msra.mxu0 %v93
    %1238 = vmatprep.subr.mxu0 %v97
    %1239 = vmatpush1.msra.mxu0 %v96
    %1240 = vmatprep.subr.mxu0 %v100
    %1241 = vmatpush1.msra.mxu0 %v99
    %1242 = vmatprep.subr.mxu0 %v103
    %1243 = vmatpush1.msra.mxu0 %v102
    %1244 = vmatprep.subr.mxu0 0.0
    %1245 = vmatpush1.msra.mxu0 0.0
    %1246 = vmatprep.subr.mxu0 0.0
    %1247 = vmatpush1.msra.mxu0 0.0
    %1248 = vmatprep.subr.mxu0 0.0
    %1249 = vmatpush1.msra.mxu0 0.0
    %1250 = vmatprep.subr.mxu0 0.0
    %1251 = vmatpush1.msra.mxu0 0.0
    %1252 = vmatprep.subr.mxu0 0.0
    %1253 = vmatpush1.msra.mxu0 0.0
    %1254 = vmatprep.subr.mxu0 0.0
    %1255 = vmatpush1.msra.mxu0 0.0
    %1256 = vmatprep.subr.mxu0 0.0
    %1257 = vmatpush1.msra.mxu0 0.0
    %1258 = vmatprep.subr.mxu0 0.0
    %1259 = vmatpush1.msra.mxu0 0.0
    %1260 = vmatprep.subr.mxu0 0.0
    %1261 = vmatpush1.msra.mxu0 0.0
    %1262 = vmatprep.subr.mxu0 0.0
    %1263 = vmatpush1.msra.mxu0 0.0
    %1264 = vmatprep.subr.mxu0 0.0
    %1265 = vmatpush1.msra.mxu0 0.0
    %1266 = vmatprep.subr.mxu0 0.0
    %1267 = vmatpush1.msra.mxu0 0.0
    %1268 = vmatprep.subr.mxu0 0.0
    %1269 = vmatpush1.msra.mxu0 0.0
    %1270 = vmatprep.subr.mxu0 0.0
    %1271 = vmatpush1.msra.mxu0 0.0
    %1272 = vmatprep.subr.mxu0 0.0
    %1273 = vmatpush1.msra.mxu0 0.0
    %1274 = vmatprep.subr.mxu0 0.0
    %1275 = vmatpush1.msra.mxu0 0.0
    %1276 = vmatprep.mubr.f32.mxu0 0.0
    %1277 = vmatmul.mubr.f32.gmra.mrb[0].mxu0 %v1198
    %v1278 = vpop.f32.mrb[0].mxu0
    %v1279 = vadd.f32 0.0, %v1278
    %v1280 = vpop.f32.mrb[0].mxu0
    %v1281 = vadd.f32 0.0, %v1280
    %1282 = vdwg.mxu0
    %1283 = vmatprep.subr.mxu0 0.0
    %1284 = vmatpush1.msra.mxu0 %v59
    %1285 = vmatprep.subr.mxu0 0.0
    %1286 = vmatpush1.msra.mxu0 %v62
    %1287 = vmatprep.subr.mxu0 0.0
    %1288 = vmatpush1.msra.mxu0 %v65
    %1289 = vmatprep.subr.mxu0 0.0
    %1290 = vmatpush1.msra.mxu0 %v68
    %1291 = vmatprep.subr.mxu0 0.0
    %1292 = vmatpush1.msra.mxu0 %v71
    %1293 = vmatprep.subr.mxu0 0.0
    %1294 = vmatpush1.msra.mxu0 %v74
    %1295 = vmatprep.subr.mxu0 0.0
    %1296 = vmatpush1.msra.mxu0 %v77
    %1297 = vmatprep.subr.mxu0 0.0
    %1298 = vmatpush1.msra.mxu0 %v80
    %1299 = vmatprep.subr.mxu0 0.0
    %1300 = vmatpush1.msra.mxu0 %v83
    %1301 = vmatprep.subr.mxu0 0.0
    %1302 = vmatpush1.msra.mxu0 %v86
    %1303 = vmatprep.subr.mxu0 0.0
    %1304 = vmatpush1.msra.mxu0 %v89
    %1305 = vmatprep.subr.mxu0 0.0
    %1306 = vmatpush1.msra.mxu0 %v92
    %1307 = vmatprep.subr.mxu0 0.0
    %1308 = vmatpush1.msra.mxu0 %v95
    %1309 = vmatprep.subr.mxu0 0.0
    %1310 = vmatpush1.msra.mxu0 %v98
    %1311 = vmatprep.subr.mxu0 0.0
    %1312 = vmatpush1.msra.mxu0 %v101
    %1313 = vmatprep.subr.mxu0 0.0
    %1314 = vmatpush1.msra.mxu0 %v104
    %1315 = vmatprep.subr.mxu0 0.0
    %1316 = vmatpush1.msra.mxu0 0.0
    %1317 = vmatprep.subr.mxu0 0.0
    %1318 = vmatpush1.msra.mxu0 0.0
    %1319 = vmatprep.subr.mxu0 0.0
    %1320 = vmatpush1.msra.mxu0 0.0
    %1321 = vmatprep.subr.mxu0 0.0
    %1322 = vmatpush1.msra.mxu0 0.0
    %1323 = vmatprep.subr.mxu0 0.0
    %1324 = vmatpush1.msra.mxu0 0.0
    %1325 = vmatprep.subr.mxu0 0.0
    %1326 = vmatpush1.msra.mxu0 0.0
    %1327 = vmatprep.subr.mxu0 0.0
    %1328 = vmatpush1.msra.mxu0 0.0
    %1329 = vmatprep.subr.mxu0 0.0
    %1330 = vmatpush1.msra.mxu0 0.0
    %1331 = vmatprep.subr.mxu0 0.0
    %1332 = vmatpush1.msra.mxu0 0.0
    %1333 = vmatprep.subr.mxu0 0.0
    %1334 = vmatpush1.msra.mxu0 0.0
    %1335 = vmatprep.subr.mxu0 0.0
    %1336 = vmatpush1.msra.mxu0 0.0
    %1337 = vmatprep.subr.mxu0 0.0
    %1338 = vmatpush1.msra.mxu0 0.0
    %1339 = vmatprep.subr.mxu0 0.0
    %1340 = vmatpush1.msra.mxu0 0.0
    %1341 = vmatprep.subr.mxu0 0.0
    %1342 = vmatpush1.msra.mxu0 0.0
    %1343 = vmatprep.subr.mxu0 0.0
    %1344 = vmatpush1.msra.mxu0 0.0
    %1345 = vmatprep.subr.mxu0 0.0
    %1346 = vmatpush1.msra.mxu0 0.0
    %1347 = vmatprep.mubr.f32.mxu0 0.0
    %1348 = vmatmul.mubr.f32.gmra.mrb[0].mxu0 %v1198
    %v1349 = vpop.f32.mrb[0].mxu0
    %v1350 = vadd.f32 0.0, %v1349
    %v1351 = vpop.f32.mrb[0].mxu0
    %1352 = vdwg.mxu0
    %v1353 = vadd.f32 %v1209, %v1279
    %v1354 = vxor.u32 %v1353, 2147483648
    %v1355 = vmul.f32 %v1354, 1.442695
    %v1356 = vpow.pop %v1355
    %v1357 = vadd.f32 %v1356, 1.0
    %v1358 = vrcp.pop %v1357
    %v1359 = vmul.f32 1.0, %v1358
    %v1360 = vadd.f32 %v1210, %v1281
    %v1361 = vxor.u32 %v1360, 2147483648
    %v1362 = vmul.f32 %v1361, 1.442695
    %v1363 = vpow.pop %v1362
    %v1364 = vadd.f32 %v1363, 1.0
    %v1365 = vrcp.pop %v1364
    %v1366 = vmul.f32 1.0, %v1365
    %v1367 = vadd.f32 %v1350, %v110
    %v1368 = vmul.f32 %v1359, %v1367
    %v1369 = vadd.f32 %v1211, %v1368
    %v1370 = vtanh.pop %v1369
    %v1371 = vsub.f32 1.0, %v1366
    %v1372 = vmul.f32 %v1371, %v1370
    %v1373 = vmul.f32 %v1366, %v1198
    %v1374 = vadd.f32 %v1372, %v1373
    %s1375 = scalar_lea.vmem %s0, 56
    %v1376 = vld [vmem:[%s1375] sm:$0xff]
    %1378 = vset.pattern.permute.xlu0 0
    %1379 = vperm.xlu0 %1378, %v1376
    %v1380 = vpop.permute.xlu0 %1379
    %v1382 = vmul.f32 %v1380, %v122
    %v1383 = vmul.f32 %v1380, %v126
    %v1384 = vmul.f32 %v1380, %v130
    %v1385 = vadd.f32 %v1382, %v141
    %v1386 = vadd.f32 %v1383, %v145
    %v1387 = vadd.f32 %v1384, %v149
    %1388 = vmatprep.subr.mxu0 %v58
    %1389 = vmatpush1.msra.mxu0 %v57
    %1390 = vmatprep.subr.mxu0 %v61
    %1391 = vmatpush1.msra.mxu0 %v60
    %1392 = vmatprep.subr.mxu0 %v64
    %1393 = vmatpush1.msra.mxu0 %v63
    %1394 = vmatprep.subr.mxu0 %v67
    %1395 = vmatpush1.msra.mxu0 %v66
    %1396 = vmatprep.subr.mxu0 %v70
    %1397 = vmatpush1.msra.mxu0 %v69
    %1398 = vmatprep.subr.mxu0 %v73
    %1399 = vmatpush1.msra.mxu0 %v72
    %1400 = vmatprep.subr.mxu0 %v76
    %1401 = vmatpush1.msra.mxu0 %v75
    %1402 = vmatprep.subr.mxu0 %v79
    %1403 = vmatpush1.msra.mxu0 %v78
    %1404 = vmatprep.subr.mxu0 %v82
    %1405 = vmatpush1.msra.mxu0 %v81
    %1406 = vmatprep.subr.mxu0 %v85
    %1407 = vmatpush1.msra.mxu0 %v84
    %1408 = vmatprep.subr.mxu0 %v88
    %1409 = vmatpush1.msra.mxu0 %v87
    %1410 = vmatprep.subr.mxu0 %v91
    %1411 = vmatpush1.msra.mxu0 %v90
    %1412 = vmatprep.subr.mxu0 %v94
    %1413 = vmatpush1.msra.mxu0 %v93
    %1414 = vmatprep.subr.mxu0 %v97
    %1415 = vmatpush1.msra.mxu0 %v96
    %1416 = vmatprep.subr.mxu0 %v100
    %1417 = vmatpush1.msra.mxu0 %v99
    %1418 = vmatprep.subr.mxu0 %v103
    %1419 = vmatpush1.msra.mxu0 %v102
    %1420 = vmatprep.subr.mxu0 0.0
    %1421 = vmatpush1.msra.mxu0 0.0
    %1422 = vmatprep.subr.mxu0 0.0
    %1423 = vmatpush1.msra.mxu0 0.0
    %1424 = vmatprep.subr.mxu0 0.0
    %1425 = vmatpush1.msra.mxu0 0.0
    %1426 = vmatprep.subr.mxu0 0.0
    %1427 = vmatpush1.msra.mxu0 0.0
    %1428 = vmatprep.subr.mxu0 0.0
    %1429 = vmatpush1.msra.mxu0 0.0
    %1430 = vmatprep.subr.mxu0 0.0
    %1431 = vmatpush1.msra.mxu0 0.0
    %1432 = vmatprep.subr.mxu0 0.0
    %1433 = vmatpush1.msra.mxu0 0.0
    %1434 = vmatprep.subr.mxu0 0.0
    %1435 = vmatpush1.msra.mxu0 0.0
    %1436 = vmatprep.subr.mxu0 0.0
    %1437 = vmatpush1.msra.mxu0 0.0
    %1438 = vmatprep.subr.mxu0 0.0
    %1439 = vmatpush1.msra.mxu0 0.0
    %1440 = vmatprep.subr.mxu0 0.0
    %1441 = vmatpush1.msra.mxu0 0.0
    %1442 = vmatprep.subr.mxu0 0.0
    %1443 = vmatpush1.msra.mxu0 0.0
    %1444 = vmatprep.subr.mxu0 0.0
    %1445 = vmatpush1.msra.mxu0 0.0
    %1446 = vmatprep.subr.mxu0 0.0
    %1447 = vmatpush1.msra.mxu0 0.0
    %1448 = vmatprep.subr.mxu0 0.0
    %1449 = vmatpush1.msra.mxu0 0.0
    %1450 = vmatprep.subr.mxu0 0.0
    %1451 = vmatpush1.msra.mxu0 0.0
    %1452 = vmatprep.mubr.f32.mxu0 0.0
    %1453 = vmatmul.mubr.f32.gmra.mrb[0].mxu0 %v1374
    %v1454 = vpop.f32.mrb[0].mxu0
    %v1455 = vadd.f32 0.0, %v1454
    %v1456 = vpop.f32.mrb[0].mxu0
    %v1457 = vadd.f32 0.0, %v1456
    %1458 = vdwg.mxu0
    %1459 = vmatprep.subr.mxu0 0.0
    %1460 = vmatpush1.msra.mxu0 %v59
    %1461 = vmatprep.subr.mxu0 0.0
    %1462 = vmatpush1.msra.mxu0 %v62
    %1463 = vmatprep.subr.mxu0 0.0
    %1464 = vmatpush1.msra.mxu0 %v65
    %1465 = vmatprep.subr.mxu0 0.0
    %1466 = vmatpush1.msra.mxu0 %v68
    %1467 = vmatprep.subr.mxu0 0.0
    %1468 = vmatpush1.msra.mxu0 %v71
    %1469 = vmatprep.subr.mxu0 0.0
    %1470 = vmatpush1.msra.mxu0 %v74
    %1471 = vmatprep.subr.mxu0 0.0
    %1472 = vmatpush1.msra.mxu0 %v77
    %1473 = vmatprep.subr.mxu0 0.0
    %1474 = vmatpush1.msra.mxu0 %v80
    %1475 = vmatprep.subr.mxu0 0.0
    %1476 = vmatpush1.msra.mxu0 %v83
    %1477 = vmatprep.subr.mxu0 0.0
    %1478 = vmatpush1.msra.mxu0 %v86
    %1479 = vmatprep.subr.mxu0 0.0
    %1480 = vmatpush1.msra.mxu0 %v89
    %1481 = vmatprep.subr.mxu0 0.0
    %1482 = vmatpush1.msra.mxu0 %v92
    %1483 = vmatprep.subr.mxu0 0.0
    %1484 = vmatpush1.msra.mxu0 %v95
    %1485 = vmatprep.subr.mxu0 0.0
    %1486 = vmatpush1.msra.mxu0 %v98
    %1487 = vmatprep.subr.mxu0 0.0
    %1488 = vmatpush1.msra.mxu0 %v101
    %1489 = vmatprep.subr.mxu0 0.0
    %1490 = vmatpush1.msra.mxu0 %v104
    %1491 = vmatprep.subr.mxu0 0.0
    %1492 = vmatpush1.msra.mxu0 0.0
    %1493 = vmatprep.subr.mxu0 0.0
    %1494 = vmatpush1.msra.mxu0 0.0
    %1495 = vmatprep.subr.mxu0 0.0
    %1496 = vmatpush1.msra.mxu0 0.0
    %1497 = vmatprep.subr.mxu0 0.0
    %1498 = vmatpush1.msra.mxu0 0.0
    %1499 = vmatprep.subr.mxu0 0.0
    %1500 = vmatpush1.msra.mxu0 0.0
    %1501 = vmatprep.subr.mxu0 0.0
    %1502 = vmatpush1.msra.mxu0 0.0
    %1503 = vmatprep.subr.mxu0 0.0
    %1504 = vmatpush1.msra.mxu0 0.0
    %1505 = vmatprep.subr.mxu0 0.0
    %1506 = vmatpush1.msra.mxu0 0.0
    %1507 = vmatprep.subr.mxu0 0.0
    %1508 = vmatpush1.msra.mxu0 0.0
    %1509 = vmatprep.subr.mxu0 0.0
    %1510 = vmatpush1.msra.mxu0 0.0
    %1511 = vmatprep.subr.mxu0 0.0
    %1512 = vmatpush1.msra.mxu0 0.0
    %1513 = vmatprep.subr.mxu0 0.0
    %1514 = vmatpush1.msra.mxu0 0.0
    %1515 = vmatprep.subr.mxu0 0.0
    %1516 = vmatpush1.msra.mxu0 0.0
    %1517 = vmatprep.subr.mxu0 0.0
    %1518 = vmatpush1.msra.mxu0 0.0
    %1519 = vmatprep.subr.mxu0 0.0
    %1520 = vmatpush1.msra.mxu0 0.0
    %1521 = vmatprep.subr.mxu0 0.0
    %1522 = vmatpush1.msra.mxu0 0.0
    %1523 = vmatprep.mubr.f32.mxu0 0.0
    %1524 = vmatmul.mubr.f32.gmra.mrb[0].mxu0 %v1374
    %v1525 = vpop.f32.mrb[0].mxu0
    %v1526 = vadd.f32 0.0, %v1525
    %v1527 = vpop.f32.mrb[0].mxu0
    %1528 = vdwg.mxu0
    %v1529 = vadd.f32 %v1385, %v1455
    %v1530 = vxor.u32 %v1529, 2147483648
    %v1531 = vmul.f32 %v1530, 1.442695
    %v1532 = vpow.pop %v1531
    %v1533 = vadd.f32 %v1532, 1.0
    %v1534 = vrcp.pop %v1533
    %v1535 = vmul.f32 1.0, %v1534
    %v1536 = vadd.f32 %v1386, %v1457
    %v1537 = vxor.u32 %v1536, 2147483648
    %v1538 = vmul.f32 %v1537, 1.442695
    %v1539 = vpow.pop %v1538
    %v1540 = vadd.f32 %v1539, 1.0
    %v1541 = vrcp.pop %v1540
    %v1542 = vmul.f32 1.0, %v1541
    %v1543 = vadd.f32 %v1526, %v110
    %v1544 = vmul.f32 %v1535, %v1543
    %v1545 = vadd.f32 %v1387, %v1544
    %v1546 = vtanh.pop %v1545
    %v1547 = vsub.f32 1.0, %v1542
    %v1548 = vmul.f32 %v1547, %v1546
    %v1549 = vmul.f32 %v1542, %v1374
    %v1550 = vadd.f32 %v1548, %v1549
    %v1551 = vld [vmem:[#allocation5] sm:$0xff]
    %v1552 = vld [vmem:[#allocation5 + $0x8] sm:$0xff]
    %v1553 = vld [vmem:[#allocation5 + $0x10] sm:$0xff]
    %v1554 = vld [vmem:[#allocation5 + $0x18] sm:$0xff]
    %v1555 = vld [vmem:[#allocation5 + $0x20] sm:$0xff]
    %v1556 = vld [vmem:[#allocation5 + $0x28] sm:$0xff]
    %v1557 = vld [vmem:[#allocation5 + $0x30] sm:$0xff]
    %v1558 = vld [vmem:[#allocation5 + $0x38] sm:$0xff]
    %v1559 = vld [vmem:[#allocation5 + $0x40] sm:$0xff]
    %v1560 = vld [vmem:[#allocation5 + $0x48] sm:$0xff]
    %v1561 = vld [vmem:[#allocation5 + $0x50] sm:$0xff]
    %v1562 = vld [vmem:[#allocation5 + $0x58] sm:$0xff]
    %v1563 = vld [vmem:[#allocation5 + $0x60] sm:$0xff]
    %v1564 = vld [vmem:[#allocation5 + $0x68] sm:$0xff]
    %v1565 = vld [vmem:[#allocation5 + $0x70] sm:$0xff]
    %v1566 = vld [vmem:[#allocation5 + $0x78] sm:$0xff]
    %v1567 = vld [vmem:[%s6] sm:$0x1]
    %v1569 = vlaneseq
    %v1570 = vshrl.u32 %v1569, 7
    %v1571 = vsub.s32 0, %v1570
    %v1572 = vrot.slane %v1567, %v1571
    %1574 = vmatprep.subr.mxu0 0.0
    %1575 = vmatpush1.msra.mxu0 %v1551
    %1576 = vmatprep.subr.mxu0 0.0
    %1577 = vmatpush1.msra.mxu0 %v1552
    %1578 = vmatprep.subr.mxu0 0.0
    %1579 = vmatpush1.msra.mxu0 %v1553
    %1580 = vmatprep.subr.mxu0 0.0
    %1581 = vmatpush1.msra.mxu0 %v1554
    %1582 = vmatprep.subr.mxu0 0.0
    %1583 = vmatpush1.msra.mxu0 %v1555
    %1584 = vmatprep.subr.mxu0 0.0
    %1585 = vmatpush1.msra.mxu0 %v1556
    %1586 = vmatprep.subr.mxu0 0.0
    %1587 = vmatpush1.msra.mxu0 %v1557
    %1588 = vmatprep.subr.mxu0 0.0
    %1589 = vmatpush1.msra.mxu0 %v1558
    %1590 = vmatprep.subr.mxu0 0.0
    %1591 = vmatpush1.msra.mxu0 %v1559
    %1592 = vmatprep.subr.mxu0 0.0
    %1593 = vmatpush1.msra.mxu0 %v1560
    %1594 = vmatprep.subr.mxu0 0.0
    %1595 = vmatpush1.msra.mxu0 %v1561
    %1596 = vmatprep.subr.mxu0 0.0
    %1597 = vmatpush1.msra.mxu0 %v1562
    %1598 = vmatprep.subr.mxu0 0.0
    %1599 = vmatpush1.msra.mxu0 %v1563
    %1600 = vmatprep.subr.mxu0 0.0
    %1601 = vmatpush1.msra.mxu0 %v1564
    %1602 = vmatprep.subr.mxu0 0.0
    %1603 = vmatpush1.msra.mxu0 %v1565
    %1604 = vmatprep.subr.mxu0 0.0
    %1605 = vmatpush1.msra.mxu0 %v1566
    %1606 = vmatprep.subr.mxu0 0.0
    %1607 = vmatpush1.msra.mxu0 0.0
    %1608 = vmatprep.subr.mxu0 0.0
    %1609 = vmatpush1.msra.mxu0 0.0
    %1610 = vmatprep.subr.mxu0 0.0
    %1611 = vmatpush1.msra.mxu0 0.0
    %1612 = vmatprep.subr.mxu0 0.0
    %1613 = vmatpush1.msra.mxu0 0.0
    %1614 = vmatprep.subr.mxu0 0.0
    %1615 = vmatpush1.msra.mxu0 0.0
    %1616 = vmatprep.subr.mxu0 0.0
    %1617 = vmatpush1.msra.mxu0 0.0
    %1618 = vmatprep.subr.mxu0 0.0
    %1619 = vmatpush1.msra.mxu0 0.0
    %1620 = vmatprep.subr.mxu0 0.0
    %1621 = vmatpush1.msra.mxu0 0.0
    %1622 = vmatprep.subr.mxu0 0.0
    %1623 = vmatpush1.msra.mxu0 0.0
    %1624 = vmatprep.subr.mxu0 0.0
    %1625 = vmatpush1.msra.mxu0 0.0
    %1626 = vmatprep.subr.mxu0 0.0
    %1627 = vmatpush1.msra.mxu0 0.0
    %1628 = vmatprep.subr.mxu0 0.0
    %1629 = vmatpush1.msra.mxu0 0.0
    %1630 = vmatprep.subr.mxu0 0.0
    %1631 = vmatpush1.msra.mxu0 0.0
    %1632 = vmatprep.subr.mxu0 0.0
    %1633 = vmatpush1.msra.mxu0 0.0
    %1634 = vmatprep.subr.mxu0 0.0
    %1635 = vmatpush1.msra.mxu0 0.0
    %1636 = vmatprep.subr.mxu0 0.0
    %1637 = vmatpush1.msra.mxu0 0.0
    %1638 = vmatprep.mubr.f32.mxu0 0.0
    %1639 = vmatmul.mubr.f32.gmra.mrb[0].mxu0 %v1550
    %v1640 = vpop.f32.mrb[0].mxu0
    %v1641 = vadd.f32 %v1572, %v1640
    %v1642 = vpop.f32.mrb[0].mxu0
    %1643 = vdwg.mxu0
    %1644 = vst [vmem:[#allocation7] sm:$0xff] %v1641
    // Predicated region
    $region38: #{tpu_custom_call.1} parent=1 // pred_check
      _
    $region39: #{tpu_custom_call.1} parent=1 // pred_check_branch
      %1646 = sbr.rel (0) target = $region41
    $region40: #{tpu_custom_call.1} parent=1 // pred_region
      %s1648 = ssub.s32 128, 128
      %1649 = vsyncadd [#allocation4], %s1648
      %s1651 = sshll.u32 [#allocation7], 4
      %s1652 = int_to_ptr.vmem [resolvable:$true] %s1651
      %1654 = dma.vmem_to_hbm [thread:$0]  %s1652, 128, %s7, [#allocation4]
    $region41: #{tpu_custom_call.1} parent=1 // pred_fallthru
      _
    // Predicated region
    $region42: #{tpu_custom_call.1} parent=1 // pred_check
      _
    $region43: #{tpu_custom_call.1} parent=1 // pred_check_branch
      %1656 = sbr.rel (0) target = $region45
    $region44: #{tpu_custom_call.1} parent=1 // pred_region
      %1657 = dma.done [#allocation4], 128
    $region45: #{tpu_custom_call.1} parent=1 // pred_fallthru
      _
    %1658 = vsyncpa [#allocation3], 1
    %1659 = vsyncpa [#allocation6], 1
    %1660 = vsyncpa [#allocation4], 1

</llo_original>
